<compile_context>
chip_gen: v7x
topology: tpu7x:2x2x1
jax: 0.10.0
libtpu: 0.0.40
codegen_flags: <defaults>
</compile_context>

<pallas_src>
import functools

import jax
import jax.numpy as jnp
from jax import lax
from jax.experimental import pallas as pl
from jax.experimental.pallas import tpu as pltpu


def _resblk_kernel(x_ref, w1_ref, w2_ref, b1_ref, b2_ref, o_ref, *, img_h):
    """One block of NB images, resident in VMEM.

    x_ref : (NB*H, W*C)        f32 input rows (channels-last, lane-dense)
    w*_ref: (W*C, 3*W*C)       dh-concatenated banded conv weights, BN scale
                               already folded into the columns (bf16 or f32)
    b*_ref: (1, W*C)           folded BN bias (per-channel, tiled over W)
    o_ref : (NB*H, W*C)        f32 output rows
    """
    m, wc = x_ref.shape                                  # m = NB * H
    x = x_ref[...]                                       # f32 residual path
    row_in_img = lax.broadcasted_iota(jnp.int32, (m, 1), 0) % img_h

    def conv3x3_bn(inp, w_ref, b_ref):
        # One wide MXU matmul covering all three vertical taps:
        #   columns [0:wc)     dh=0 -> input row r contributes to out row r+1
        #   columns [wc:2wc)   dh=1 -> input row r contributes to out row r
        #   columns [2wc:3wc)  dh=2 -> input row r contributes to out row r-1
        y = jnp.dot(inp.astype(w_ref.dtype), w_ref[...],
                    preferred_element_type=jnp.float32)          # (m, 3*wc) f32
        top, mid, bot = y[:, :wc], y[:, wc:2 * wc], y[:, 2 * wc:]
        # Vertical halo: sublane roll (+/-1 row) over the whole flattened block
        # plus a per-image row%H mask so nothing leaks across image boundaries.
        acc = mid
        acc = acc + jnp.where(row_in_img >= 1,
                              pltpu.roll(top, shift=1, axis=0), 0.0)
        acc = acc + jnp.where(row_in_img <= img_h - 2,
                              pltpu.roll(bot, shift=m - 1, axis=0), 0.0)
        return acc + b_ref[...]

    out1 = jnp.maximum(conv3x3_bn(x, w1_ref, b1_ref), 0.0)
    out2 = conv3x3_bn(out1, w2_ref, b2_ref)
    # Residual add (Cin == Cout, stride=1, downsample=None) + ReLU; dropout is
    # eval-mode identity.
    o_ref[...] = jnp.maximum(out2 + x, 0.0).astype(o_ref.dtype)


def _banded_conv_weights(w_hwio, width, scale, dtype):
    """(3,3,Cin,Cout) HWIO weights -> (W*Cin, 3*W*Cout) dh-concatenated banded
    matrices, with the per-output-channel BN scale folded into the columns.

    Column block dh implements, on one flattened image row, the 1-D 'SAME'
    convolution along W for vertical tap dh: the 3 horizontal taps and Cin are
    folded into the contraction dim, and the zero padding at the W boundary is
    simply the absence of band entries.
    """
    _, _, cin, cout = w_hwio.shape
    w = (w_hwio * scale).astype(jnp.float32)             # fold BN scale per Cout
    mats = []
    for dh in range(3):
        m = jnp.zeros((width * cin, width * cout), jnp.float32)
        for dw in range(3):
            band = jnp.eye(width, width, k=1 - dw, dtype=jnp.float32)  # w_in = w_out + dw - 1
            m = m + jnp.kron(band, w[dh, dw])
        mats.append(m)
    return jnp.concatenate(mats, axis=1).astype(dtype)    # (W*Cin, 3*W*Cout)


def _pick_images_per_block(n, target):
    """Largest divisor of n that is <= min(target, max(n // 2, 1)).

    Batches several images per grid step to amortize per-step overhead while
    keeping the grid length >= 2 whenever n >= 2 (so both v7x TensorCores get
    work under dimension_semantics=("parallel",))."""
    cap = min(target, max(n // 2, 1))
    for nb in range(cap, 0, -1):
        if n % nb == 0:
            return nb
    return 1


@functools.partial(jax.jit, static_argnames=("images_per_block", "compute_dtype"))
def resblk_basic_nhwc(x_nhwc, w1, w2, s1, b1, s2, b2, *,
                      images_per_block=8, compute_dtype=jnp.bfloat16):
    """Primary entry point (NHWC, no HBM relayout passes).

    x_nhwc: (N, H, W, Cin) float32; w1/w2 in HWIO; s*/b* are the BN running
    stats folded to per-channel scale/bias.
    """
    N, H, W, Cin = x_nhwc.shape
    Cout = w1.shape[-1]
    assert w1.shape == (3, 3, Cin, Cout) and w2.shape == (3, 3, Cout, Cout), \
        "only kernel_size=3, dilation=1 supported"
    assert Cin == Cout, "identity residual requires inplanes == outplanes (downsample=None)"

    nb = _pick_images_per_block(N, images_per_block)
    m_blk = nb * H
    wc_in, wc_out = W * Cin, W * Cout

    # (N, H, W, C) -> (N*H, W*C): contiguous reshape, no HBM relayout pass.
    x2d = x_nhwc.reshape(N * H, wc_in).astype(jnp.float32)

    w1b = _banded_conv_weights(w1, W, s1, compute_dtype)   # (W*Cin,  3*W*Cout)
    w2b = _banded_conv_weights(w2, W, s2, compute_dtype)   # (W*Cout, 3*W*Cout)
    b1t = jnp.tile(b1.astype(jnp.float32), W).reshape(1, wc_out)
    b2t = jnp.tile(b2.astype(jnp.float32), W).reshape(1, wc_out)

    def const(shape):
        return pl.BlockSpec(shape, lambda i: (0,) * len(shape))

    out2d = pl.pallas_call(
        functools.partial(_resblk_kernel, img_h=H),
        out_shape=jax.ShapeDtypeStruct((N * H, wc_out), jnp.float32),
        grid=(N // nb,),
        in_specs=[
            pl.BlockSpec((m_blk, wc_in), lambda i: (i, 0)),   # NB images / step
            const((wc_in, 3 * wc_out)),                       # banded conv1 (+BN1 scale)
            const((wc_out, 3 * wc_out)),                      # banded conv2 (+BN2 scale)
            const((1, wc_out)),                               # BN1 bias (tiled over W)
            const((1, wc_out)),                               # BN2 bias (tiled over W)
        ],
        out_specs=pl.BlockSpec((m_blk, wc_out), lambda i: (i, 0)),
        compiler_params=pltpu.CompilerParams(
            dimension_semantics=("parallel",),     # megacore split over image blocks
            # Per-step footprint (<1 MiB here: 2x2 activation buffers + weights)
            # stays far under this on all of v5e/v6e/v7x.
            vmem_limit_bytes=32 * 1024 * 1024),
    )(x2d, w1b, w2b, b1t, b2t)

    return out2d.reshape(N, H, W, Cout)


def resblk_basic_nchw(x_nchw, w1, w2, s1, b1, s2, b2, **kwargs):
    """Drop-in NCHW interface matching the PyTorch module.  Prefer the NHWC
    entry point: these two transposes each cost a full HBM read+write pass."""
    x = jnp.transpose(x_nchw, (0, 2, 3, 1))
    y = resblk_basic_nhwc(x, w1, w2, s1, b1, s2, b2, **kwargs)
    return jnp.transpose(y, (0, 3, 1, 2))


def _reference_nhwc(x, w1, w2, s1, b1, s2, b2):
    """Pure-JAX reference (inference-mode BN, eval-mode dropout), NHWC."""
    dn = ('NHWC', 'HWIO', 'NHWC')
    y = lax.conv_general_dilated(x, w1, (1, 1), 'SAME', dimension_numbers=dn)
    y = jnp.maximum(y * s1 + b1, 0.0)
    y = lax.conv_general_dilated(y, w2, (1, 1), 'SAME', dimension_numbers=dn)
    y = y * s2 + b2
    return jnp.maximum(y + x, 0.0)


if __name__ == "__main__":
    key = jax.random.PRNGKey(0)
    kx, kw1, kw2, kg1, kb1, km1, kg2, kb2, km2 = jax.random.split(key, 9)

    # Module defaults (inplanes == outplanes, stride=1, no downsample/pooling).
    # W * C = 128 -> lane-dense blocks; N=16 with 8 images/block -> grid of 2,
    # so both v7x TensorCores get a block.
    N, H, W, C = 16, 16, 16, 8
    eps = 1e-5

    x = jax.random.normal(kx, (N, H, W, C), jnp.float32)

    # Conv weights in HWIO (PyTorch stores OIHW; equivalent up to transpose).
    w1 = 0.1 * jax.random.normal(kw1, (3, 3, C, C), jnp.float32)
    w2 = 0.1 * jax.random.normal(kw2, (3, 3, C, C), jnp.float32)

    # BatchNorm params + running stats (deterministic), folded to scale/bias.
    gamma1 = 1.0 + 0.1 * jax.random.normal(kg1, (C,), jnp.float32)
    beta1 = 0.1 * jax.random.normal(kb1, (C,), jnp.float32)
    mean1 = 0.05 * jax.random.normal(km1, (C,), jnp.float32)
    var1 = jnp.ones((C,), jnp.float32)

    gamma2 = 1.0 + 0.1 * jax.random.normal(kg2, (C,), jnp.float32)
    beta2 = 0.1 * jax.random.normal(kb2, (C,), jnp.float32)
    mean2 = 0.05 * jax.random.normal(km2, (C,), jnp.float32)
    var2 = jnp.ones((C,), jnp.float32)

    s1 = gamma1 / jnp.sqrt(var1 + eps)
    b1 = beta1 - mean1 * s1
    s2 = gamma2 / jnp.sqrt(var2 + eps)
    b2 = beta2 - mean2 * s2

    ref = jax.block_until_ready(_reference_nhwc(x, w1, w2, s1, b1, s2, b2))

    # Fast path: bf16 MXU inputs, f32 accumulation (v6e/v7x recommendation).
    out_bf16 = jax.block_until_ready(
        resblk_basic_nhwc(x, w1, w2, s1, b1, s2, b2,
                          compute_dtype=jnp.bfloat16))
    assert out_bf16.shape == (N, H, W, C)
    assert jnp.allclose(out_bf16, ref, atol=5e-2, rtol=5e-2), \
        "bf16 kernel mismatch vs reference"

    # Bit-closer f32 path (matches the f32 PyTorch module numerics).
    out_f32 = jax.block_until_ready(
        resblk_basic_nhwc(x, w1, w2, s1, b1, s2, b2,
                          compute_dtype=jnp.float32))
    assert jnp.allclose(out_f32, ref, atol=2e-3, rtol=2e-3), \
        "f32 kernel mismatch vs reference"

    print("KERNEL_OK")
</pallas_src>

<mosaic_0001>
module attributes {stable_mosaic.version = 11 : i64} {
  func.func @_resblk_kernel(%arg0: i32, %arg1: memref<128x128xf32, #tpu.memory_space<vmem>>, %arg2: memref<128x384xbf16, #tpu.memory_space<vmem>>, %arg3: memref<128x384xbf16, #tpu.memory_space<vmem>>, %arg4: memref<1x128xf32, #tpu.memory_space<vmem>>, %arg5: memref<1x128xf32, #tpu.memory_space<vmem>>, %arg6: memref<128x128xf32, #tpu.memory_space<vmem>>) attributes {dimension_semantics = [#tpu.dimension_semantics<parallel>], iteration_bounds = array<i64: 2>, scalar_prefetch = 0 : i64, scratch_operands = 0 : i64, tpu.core_type = #tpu.core_type<tc>, window_params = [{transform_indices = @transform_0, window_bounds = array<i64: 128, 128>}, {pipeline_mode = #tpu.pipeline_mode<synchronous>, transform_indices = @transform_1, window_bounds = array<i64: 128, 384>}, {pipeline_mode = #tpu.pipeline_mode<synchronous>, transform_indices = @transform_2, window_bounds = array<i64: 128, 384>}, {pipeline_mode = #tpu.pipeline_mode<synchronous>, transform_indices = @transform_3, window_bounds = array<i64: 1, 128>}, {pipeline_mode = #tpu.pipeline_mode<synchronous>, transform_indices = @transform_4, window_bounds = array<i64: 1, 128>}, {transform_indices = @transform_5, window_bounds = array<i64: 128, 128>}]} {
    %c0 = arith.constant 0 : index
    %c0_0 = arith.constant 0 : index
    %0 = vector.load %arg1[%c0, %c0_0] : memref<128x128xf32, #tpu.memory_space<vmem>>, vector<128x128xf32>
    %1 = tpu.iota {dimensions = array<i32: 0>} : vector<128x1xi32>
    %c16_i32 = arith.constant 16 : i32
    %c0_i32 = arith.constant 0 : i32
    %2 = arith.cmpi eq, %c16_i32, %c0_i32 : i32
    %c1_i32 = arith.constant 1 : i32
    %3 = arith.select %2, %c1_i32, %c16_i32 : i32
    %4 = vector.broadcast %3 : i32 to vector<128x1xi32>
    %5 = arith.remsi %1, %4 : vector<128x1xi32>
    %c0_i32_1 = arith.constant 0 : i32
    %6 = vector.broadcast %c0_i32_1 : i32 to vector<128x1xi32>
    %7 = arith.cmpi ne, %5, %6 : vector<128x1xi32>
    %c0_i32_2 = arith.constant 0 : i32
    %8 = vector.broadcast %c0_i32_2 : i32 to vector<128x1xi32>
    %9 = arith.cmpi slt, %5, %8 : vector<128x1xi32>
    %c0_i32_3 = arith.constant 0 : i32
    %10 = arith.cmpi slt, %3, %c0_i32_3 : i32
    %11 = vector.broadcast %10 : i1 to vector<128x1xi1>
    %12 = vector.broadcast %11 : vector<128x1xi1> to vector<128x1xi1>
    %13 = arith.xori %9, %12 : vector<128x1xi1>
    %14 = arith.andi %13, %7 : vector<128x1xi1>
    %15 = vector.broadcast %3 : i32 to vector<128x1xi32>
    %16 = arith.addi %5, %15 : vector<128x1xi32>
    %17 = arith.select %14, %16, %5 : vector<128x1xi1>, vector<128x1xi32>
    %18 = arith.truncf %0 : vector<128x128xf32> to vector<128x128xbf16>
    %c0_4 = arith.constant 0 : index
    %c0_5 = arith.constant 0 : index
    %19 = vector.load %arg2[%c0_4, %c0_5] : memref<128x384xbf16, #tpu.memory_space<vmem>>, vector<128x384xbf16>
    %cst = arith.constant dense<0.000000e+00> : vector<128x384xf32>
    %20 = tpu.matmul %18, %19, %cst {dimension_numbers = #tpu.dot_dimension_numbers<[1], [0], [0], [1], [0, 0, 1, 1], [], []>} : vector<128x128xbf16>, vector<128x384xbf16>, vector<128x384xf32> -> vector<128x384xf32>
    %21 = vector.extract_strided_slice %20 {offsets = [0, 0], sizes = [128, 128], strides = [1, 1]} : vector<128x384xf32> to vector<128x128xf32>
    %22 = vector.extract_strided_slice %20 {offsets = [0, 128], sizes = [128, 128], strides = [1, 1]} : vector<128x384xf32> to vector<128x128xf32>
    %23 = vector.extract_strided_slice %20 {offsets = [0, 256], sizes = [128, 128], strides = [1, 1]} : vector<128x384xf32> to vector<128x128xf32>
    %c1_i32_6 = arith.constant 1 : i32
    %24 = vector.broadcast %c1_i32_6 : i32 to vector<128x1xi32>
    %25 = arith.cmpi sge, %17, %24 : vector<128x1xi32>
    %c1_i32_7 = arith.constant 1 : i32
    %26 = tpu.dynamic_rotate %21 by %c1_i32_7 dim 0 : vector<128x128xf32>, i32 -> vector<128x128xf32>
    %cst_8 = arith.constant 0.000000e+00 : f32
    %27 = vector.shape_cast %25 : vector<128x1xi1> to vector<128x1xi1>
    %28 = vector.broadcast %27 : vector<128x1xi1> to vector<128x128xi1>
    %29 = vector.broadcast %cst_8 : f32 to vector<128x128xf32>
    %30 = arith.select %28, %26, %29 : vector<128x128xi1>, vector<128x128xf32>
    %31 = arith.addf %22, %30 : vector<128x128xf32>
    %c14_i32 = arith.constant 14 : i32
    %32 = vector.broadcast %c14_i32 : i32 to vector<128x1xi32>
    %33 = arith.cmpi sle, %17, %32 : vector<128x1xi32>
    %c127_i32 = arith.constant 127 : i32
    %34 = tpu.dynamic_rotate %23 by %c127_i32 dim 0 : vector<128x128xf32>, i32 -> vector<128x128xf32>
    %cst_9 = arith.constant 0.000000e+00 : f32
    %35 = vector.shape_cast %33 : vector<128x1xi1> to vector<128x1xi1>
    %36 = vector.broadcast %35 : vector<128x1xi1> to vector<128x128xi1>
    %37 = vector.broadcast %cst_9 : f32 to vector<128x128xf32>
    %38 = arith.select %36, %34, %37 : vector<128x128xi1>, vector<128x128xf32>
    %39 = arith.addf %31, %38 : vector<128x128xf32>
    %c0_10 = arith.constant 0 : index
    %c0_11 = arith.constant 0 : index
    %40 = vector.load %arg4[%c0_10, %c0_11] : memref<1x128xf32, #tpu.memory_space<vmem>>, vector<1x128xf32>
    %41 = vector.broadcast %40 : vector<1x128xf32> to vector<128x128xf32>
    %42 = arith.addf %39, %41 : vector<128x128xf32>
    %cst_12 = arith.constant 0.000000e+00 : f32
    %43 = vector.broadcast %cst_12 : f32 to vector<128x128xf32>
    %44 = arith.maximumf %42, %43 : vector<128x128xf32>
    %45 = arith.truncf %44 : vector<128x128xf32> to vector<128x128xbf16>
    %c0_13 = arith.constant 0 : index
    %c0_14 = arith.constant 0 : index
    %46 = vector.load %arg3[%c0_13, %c0_14] : memref<128x384xbf16, #tpu.memory_space<vmem>>, vector<128x384xbf16>
    %cst_15 = arith.constant dense<0.000000e+00> : vector<128x384xf32>
    %47 = tpu.matmul %45, %46, %cst_15 {dimension_numbers = #tpu.dot_dimension_numbers<[1], [0], [0], [1], [0, 0, 1, 1], [], []>} : vector<128x128xbf16>, vector<128x384xbf16>, vector<128x384xf32> -> vector<128x384xf32>
    %48 = vector.extract_strided_slice %47 {offsets = [0, 0], sizes = [128, 128], strides = [1, 1]} : vector<128x384xf32> to vector<128x128xf32>
    %49 = vector.extract_strided_slice %47 {offsets = [0, 128], sizes = [128, 128], strides = [1, 1]} : vector<128x384xf32> to vector<128x128xf32>
    %50 = vector.extract_strided_slice %47 {offsets = [0, 256], sizes = [128, 128], strides = [1, 1]} : vector<128x384xf32> to vector<128x128xf32>
    %c1_i32_16 = arith.constant 1 : i32
    %51 = vector.broadcast %c1_i32_16 : i32 to vector<128x1xi32>
    %52 = arith.cmpi sge, %17, %51 : vector<128x1xi32>
    %c1_i32_17 = arith.constant 1 : i32
    %53 = tpu.dynamic_rotate %48 by %c1_i32_17 dim 0 : vector<128x128xf32>, i32 -> vector<128x128xf32>
    %cst_18 = arith.constant 0.000000e+00 : f32
    %54 = vector.shape_cast %52 : vector<128x1xi1> to vector<128x1xi1>
    %55 = vector.broadcast %54 : vector<128x1xi1> to vector<128x128xi1>
    %56 = vector.broadcast %cst_18 : f32 to vector<128x128xf32>
    %57 = arith.select %55, %53, %56 : vector<128x128xi1>, vector<128x128xf32>
    %58 = arith.addf %49, %57 : vector<128x128xf32>
    %c14_i32_19 = arith.constant 14 : i32
    %59 = vector.broadcast %c14_i32_19 : i32 to vector<128x1xi32>
    %60 = arith.cmpi sle, %17, %59 : vector<128x1xi32>
    %c127_i32_20 = arith.constant 127 : i32
    %61 = tpu.dynamic_rotate %50 by %c127_i32_20 dim 0 : vector<128x128xf32>, i32 -> vector<128x128xf32>
    %cst_21 = arith.constant 0.000000e+00 : f32
    %62 = vector.shape_cast %60 : vector<128x1xi1> to vector<128x1xi1>
    %63 = vector.broadcast %62 : vector<128x1xi1> to vector<128x128xi1>
    %64 = vector.broadcast %cst_21 : f32 to vector<128x128xf32>
    %65 = arith.select %63, %61, %64 : vector<128x128xi1>, vector<128x128xf32>
    %66 = arith.addf %58, %65 : vector<128x128xf32>
    %c0_22 = arith.constant 0 : index
    %c0_23 = arith.constant 0 : index
    %67 = vector.load %arg5[%c0_22, %c0_23] : memref<1x128xf32, #tpu.memory_space<vmem>>, vector<1x128xf32>
    %68 = vector.broadcast %67 : vector<1x128xf32> to vector<128x128xf32>
    %69 = arith.addf %66, %68 : vector<128x128xf32>
    %70 = arith.addf %69, %0 : vector<128x128xf32>
    %cst_24 = arith.constant 0.000000e+00 : f32
    %71 = vector.broadcast %cst_24 : f32 to vector<128x128xf32>
    %72 = arith.maximumf %70, %71 : vector<128x128xf32>
    %c0_25 = arith.constant 0 : index
    %c0_26 = arith.constant 0 : index
    %73 = vector.load %arg6[%c0_25, %c0_26] : memref<128x128xf32, #tpu.memory_space<vmem>>, vector<128x128xf32>
    tpu.vector_store %arg6[%c0_25, %c0_26], %72 {strides = array<i32>} : memref<128x128xf32, #tpu.memory_space<vmem>>, vector<128x128xf32>,
    return
  }
  func.func @transform_0(%arg0: i32) -> (i32, i32) {
    %c0_i32 = arith.constant 0 : i32
    %c0_i32_0 = arith.constant 0 : i32
    return %arg0, %c0_i32 : i32, i32
  }
  func.func @transform_1(%arg0: i32) -> (i32, i32) {
    %c0_i32 = arith.constant 0 : i32
    %c0_i32_0 = arith.constant 0 : i32
    %c0_i32_1 = arith.constant 0 : i32
    return %c0_i32, %c0_i32_0 : i32, i32
  }
  func.func @transform_2(%arg0: i32) -> (i32, i32) {
    %c0_i32 = arith.constant 0 : i32
    %c0_i32_0 = arith.constant 0 : i32
    %c0_i32_1 = arith.constant 0 : i32
    return %c0_i32, %c0_i32_0 : i32, i32
  }
  func.func @transform_3(%arg0: i32) -> (i32, i32) {
    %c0_i32 = arith.constant 0 : i32
    %c0_i32_0 = arith.constant 0 : i32
    %c0_i32_1 = arith.constant 0 : i32
    return %c0_i32, %c0_i32_0 : i32, i32
  }
  func.func @transform_4(%arg0: i32) -> (i32, i32) {
    %c0_i32 = arith.constant 0 : i32
    %c0_i32_0 = arith.constant 0 : i32
    %c0_i32_1 = arith.constant 0 : i32
    return %c0_i32, %c0_i32_0 : i32, i32
  }
  func.func @transform_5(%arg0: i32) -> (i32, i32) {
    %c0_i32 = arith.constant 0 : i32
    %c0_i32_0 = arith.constant 0 : i32
    return %arg0, %c0_i32 : i32, i32
  }
}

</mosaic_0001>

<llo_original>
// kernel: tile.13
$region0: #{tile.13}
  #allocation0 [shape = 's32[1]{0}', space=sflag, size = 0x4, scoped, tag = 'scoped memory for tile.13']
  %s0 = inlined_call_operand.vmem [shape: f32[8], index: 0, kind: input, shape index: {}]
  %s1 = inlined_call_operand.vmem [shape: f32[16,8], index: 1, kind: output, shape index: {}]
  // Predicated region
  $region2: #{tile.13} parent=0 // pred_check
    _
  $region3: #{tile.13} parent=0 // pred_check_branch
    %3 = sbr.rel (0) target = $region5
  $region4: #{tile.13} parent=0 // pred_region
    _
  $region5: #{tile.13} parent=0 // pred_fallthru
    _
  %v4 = vld [vmem:[%s0] ss:$0 sm:$0xff]
  %5 = vst [vmem:[%s1] sm:$0xff] %v4
  %s6 = scalar_lea.vmem %s1, 8
  %7 = vst [vmem:[%s6] sm:$0xff] %v4

// kernel: tile.14
$region0: #{tile.14}
  %s0 = inlined_call_operand.vmem [shape: f32[16,8], index: 0, kind: input, shape index: {}]
  %s1 = inlined_call_operand.vmem [shape: f32[1,128], index: 1, kind: output, shape index: {}]
  $region1: #{tile.14} parent=0
    #allocation0 [shape = 'u8[4096]{0}', space=vmem, size = 0x1000, scoped, tag = 'scoped mem for output reshape']
    %v2 = vld [vmem:[%s0] sm:$0x1]
    %vm3 = vcmask 64512
    %4 = vst.msk [vmem:[#allocation0] sm:$0x1] %vm3, %v2
    %s5 = scalar_lea.vmem %s0, 15
    %v6 = vld [vmem:[%s5] sm:$0x1]
    %7 = vrot.lane.b32.xlu0 %v6, 120
    %v8 = vpop.permute.xlu0 %7
    %vm9 = vcmask 1048512
    %10 = vst.msk [vmem:[#allocation0] sm:$0x1] %vm9, %v8
    %s11 = scalar_lea.vmem %s0, 14
    %v12 = vld [vmem:[%s11] sm:$0x1]
    %13 = vrot.lane.b32.xlu0 %v12, 112
    %v14 = vpop.permute.xlu0 %13
    %vm15 = vcmask 982912
    %16 = vst.msk [vmem:[#allocation0] sm:$0x1] %vm15, %v14
    %s17 = scalar_lea.vmem %s0, 13
    %v18 = vld [vmem:[%s17] sm:$0x1]
    %19 = vrot.lane.b32.xlu0 %v18, 104
    %v20 = vpop.permute.xlu0 %19
    %vm21 = vcmask 917312
    %22 = vst.msk [vmem:[#allocation0] sm:$0x1] %vm21, %v20
    %s23 = scalar_lea.vmem %s0, 12
    %v24 = vld [vmem:[%s23] sm:$0x1]
    %25 = vrot.lane.b32.xlu0 %v24, 96
    %v26 = vpop.permute.xlu0 %25
    %vm27 = vcmask 851712
    %28 = vst.msk [vmem:[#allocation0] sm:$0x1] %vm27, %v26
    %s29 = scalar_lea.vmem %s0, 11
    %v30 = vld [vmem:[%s29] sm:$0x1]
    %31 = vrot.lane.b32.xlu0 %v30, 88
    %v32 = vpop.permute.xlu0 %31
    %vm33 = vcmask 786112
    %34 = vst.msk [vmem:[#allocation0] sm:$0x1] %vm33, %v32
    %s35 = scalar_lea.vmem %s0, 10
    %v36 = vld [vmem:[%s35] sm:$0x1]
    %37 = vrot.lane.b32.xlu0 %v36, 80
    %v38 = vpop.permute.xlu0 %37
    %vm39 = vcmask 720512
    %40 = vst.msk [vmem:[#allocation0] sm:$0x1] %vm39, %v38
    %s41 = scalar_lea.vmem %s0, 9
    %v42 = vld [vmem:[%s41] sm:$0x1]
    %43 = vrot.lane.b32.xlu0 %v42, 72
    %v44 = vpop.permute.xlu0 %43
    %vm45 = vcmask 654912
    %46 = vst.msk [vmem:[#allocation0] sm:$0x1] %vm45, %v44
    %s47 = scalar_lea.vmem %s0, 8
    %v48 = vld [vmem:[%s47] sm:$0x1]
    %49 = vrot.lane.b32.xlu0 %v48, 64
    %v50 = vpop.permute.xlu0 %49
    %vm51 = vcmask 589312
    %52 = vst.msk [vmem:[#allocation0] sm:$0x1] %vm51, %v50
    %s53 = scalar_lea.vmem %s0, 7
    %v54 = vld [vmem:[%s53] sm:$0x1]
    %55 = vrot.lane.b32.xlu0 %v54, 56
    %v56 = vpop.permute.xlu0 %55
    %vm57 = vcmask 523712
    %58 = vst.msk [vmem:[#allocation0] sm:$0x1] %vm57, %v56
    %s59 = scalar_lea.vmem %s0, 6
    %v60 = vld [vmem:[%s59] sm:$0x1]
    %61 = vrot.lane.b32.xlu0 %v60, 48
    %v62 = vpop.permute.xlu0 %61
    %vm63 = vcmask 458112
    %64 = vst.msk [vmem:[#allocation0] sm:$0x1] %vm63, %v62
    %s65 = scalar_lea.vmem %s0, 5
    %v66 = vld [vmem:[%s65] sm:$0x1]
    %67 = vrot.lane.b32.xlu0 %v66, 40
    %v68 = vpop.permute.xlu0 %67
    %vm69 = vcmask 392512
    %70 = vst.msk [vmem:[#allocation0] sm:$0x1] %vm69, %v68
    %s71 = scalar_lea.vmem %s0, 4
    %v72 = vld [vmem:[%s71] sm:$0x1]
    %73 = vrot.lane.b32.xlu0 %v72, 32
    %v74 = vpop.permute.xlu0 %73
    %vm75 = vcmask 326912
    %76 = vst.msk [vmem:[#allocation0] sm:$0x1] %vm75, %v74
    %s77 = scalar_lea.vmem %s0, 3
    %v78 = vld [vmem:[%s77] sm:$0x1]
    %79 = vrot.lane.b32.xlu0 %v78, 24
    %v80 = vpop.permute.xlu0 %79
    %vm81 = vcmask 261312
    %82 = vst.msk [vmem:[#allocation0] sm:$0x1] %vm81, %v80
    %s83 = scalar_lea.vmem %s0, 2
    %v84 = vld [vmem:[%s83] sm:$0x1]
    %85 = vrot.lane.b32.xlu0 %v84, 16
    %v86 = vpop.permute.xlu0 %85
    %vm87 = vcmask 195712
    %88 = vst.msk [vmem:[#allocation0] sm:$0x1] %vm87, %v86
    %s89 = scalar_lea.vmem %s0, 1
    %v90 = vld [vmem:[%s89] sm:$0x1]
    %91 = vrot.lane.b32.xlu0 %v90, 8
    %v92 = vpop.permute.xlu0 %91
    %vm93 = vcmask 130112
    %94 = vst.msk [vmem:[#allocation0] sm:$0x1] %vm93, %v92
    %s96 = sshllo.u32 0, 1
    %v98 = vld [vmem:[#allocation0] sm:%s96]
    %s99 = sshllo.u32 0, 1
    %100 = vst [vmem:[%s1] sm:%s99] %v98

// kernel: resblk_basic_nhwc.1
$region0: #{resblk_basic_nhwc.1}
  #allocation0 [shape = 'u32[]', space=smem, size = 0x4, offset = 0x4, fixed_abs, tag = 'smem constant byte address 0x4 - core index']
  #allocation1 [shape = 'u32[144,128]{1,0:T(1,128)}', space=vmem, size = 0x12000, scoped, tag = 'internal scratch']
  %s0 = inlined_call_operand.vmem [shape: f32[256,128], index: 0, kind: input, shape index: {}]
  %s1 = inlined_call_operand.vmem [shape: bf16[128,384], index: 1, kind: input, shape index: {}]
  %s2 = inlined_call_operand.vmem [shape: bf16[128,384], index: 2, kind: input, shape index: {}]
  %s3 = inlined_call_operand.vmem [shape: f32[1,128], index: 3, kind: input, shape index: {}]
  %s4 = inlined_call_operand.vmem [shape: f32[1,128], index: 4, kind: input, shape index: {}]
  %s5 = inlined_call_operand.vmem [shape: f32[256,128], index: 5, kind: output, shape index: {}]
  %s6 = sld [smem:[#allocation0]]
  $region53: #{resblk_basic_nhwc.1} parent=0
    _
  %s8 = ssub.s32 1, %s6
  %s9 = scalar_select 0, %s8, %s6
  loop: start=0, step=1, limit=4
  $region2: #{resblk_basic_nhwc.1} parent=0 // loop_pre_header
    _
  $region3: #{resblk_basic_nhwc.1} parent=0 // loop_header
    %s11 = sphi 0, %s15
    %p12 = scmp.ge.s32.totalorder %s11, 4
    %s21 = sphi 0, %s23
    %s24 = sphi 0, %s21
    %s25 = sphi 0, %s24
    %s41 = sphi 0, %s25
    %s45 = sphi 0, %s45
    %s47 = sphi 0, %s45
    %s48 = sphi 0, %s47
    %s62 = sphi 0, %s48
    %s66 = sphi 0, %s66
    %s68 = sphi 0, %s66
    %s69 = sphi 0, %s68
    %s83 = sphi 0, %s69
    %s87 = sphi 0, %s87
    %s89 = sphi 0, %s87
    %s90 = sphi 0, %s89
    %s104 = sphi 0, %s90
    %s108 = sphi 0, %s108
    %s110 = sphi 0, %s108
    %s111 = sphi 0, %s110
    %s125 = sphi 0, %s111
    %s131 = sphi 0, %s133
    %s134 = sphi 0, %s131
    %s135 = sphi 0, %s134
    %s151 = sphi 0, %s135
  $region4: #{resblk_basic_nhwc.1} parent=0 // loop_header_branch
    %14 = sbr.rel (%p12) target = $region8
  $region5: #{resblk_basic_nhwc.1} parent=0 // loop_body
    %s16 = ssub.s32 %s11, 1
    %s17 = ssub.s32 %s11, 2
    %s18 = sadd.s32 %s11, 1
    %s19 = ssub.s32 %s11, %s18
    %p20 = scmp.eq.s32.totalorder %s19, 0
    %s22 = sadd.s32 %s21, 1
    %s23 = scalar_select %p20, %s21, %s22
    %p26 = pneg %p20
    %p27 = scmp.eq.s32.totalorder %s11, 1
    %p28 = por %p26, %p27
    %p29 = scmp.ne.s32.totalorder %s21, %s24
    %p30 = scmp.eq.s32.totalorder %s11, 0
    %p31 = por %p29, %p30
    %p32 = scmp.ne.s32.totalorder %s21, %s24
    %p33 = scmp.eq.s32.totalorder %s16, 1
    %p34 = por %p32, %p33
    %p35 = scmp.ne.s32.totalorder %s24, %s25
    %p36 = scmp.eq.s32.totalorder %s16, 0
    %p37 = por %p35, %p36
    %p38 = scmp.ne.s32.totalorder %s24, %s25
    %p39 = scmp.eq.s32.totalorder %s17, 1
    %p40 = por %p38, %p39
    %p42 = scmp.ne.s32.totalorder %s25, %s41
    %p43 = scmp.eq.s32.totalorder %s17, 0
    %p44 = por %p42, %p43
    %s46 = sadd.s32 %s45, 1
    %p49 = scmp.eq.s32.totalorder %s11, 1
    %p50 = scmp.ne.s32.totalorder %s45, %s47
    %p51 = scmp.eq.s32.totalorder %s11, 0
    %p52 = por %p50, %p51
    %p53 = scmp.ne.s32.totalorder %s45, %s47
    %p54 = scmp.eq.s32.totalorder %s16, 1
    %p55 = por %p53, %p54
    %p56 = scmp.ne.s32.totalorder %s47, %s48
    %p57 = scmp.eq.s32.totalorder %s16, 0
    %p58 = por %p56, %p57
    %p59 = scmp.ne.s32.totalorder %s47, %s48
    %p60 = scmp.eq.s32.totalorder %s17, 1
    %p61 = por %p59, %p60
    %p63 = scmp.ne.s32.totalorder %s48, %s62
    %p64 = scmp.eq.s32.totalorder %s17, 0
    %p65 = por %p63, %p64
    %s67 = sadd.s32 %s66, 1
    %p70 = scmp.eq.s32.totalorder %s11, 1
    %p71 = scmp.ne.s32.totalorder %s66, %s68
    %p72 = scmp.eq.s32.totalorder %s11, 0
    %p73 = por %p71, %p72
    %p74 = scmp.ne.s32.totalorder %s66, %s68
    %p75 = scmp.eq.s32.totalorder %s16, 1
    %p76 = por %p74, %p75
    %p77 = scmp.ne.s32.totalorder %s68, %s69
    %p78 = scmp.eq.s32.totalorder %s16, 0
    %p79 = por %p77, %p78
    %p80 = scmp.ne.s32.totalorder %s68, %s69
    %p81 = scmp.eq.s32.totalorder %s17, 1
    %p82 = por %p80, %p81
    %p84 = scmp.ne.s32.totalorder %s69, %s83
    %p85 = scmp.eq.s32.totalorder %s17, 0
    %p86 = por %p84, %p85
    %s88 = sadd.s32 %s87, 1
    %p91 = scmp.eq.s32.totalorder %s11, 1
    %p92 = scmp.ne.s32.totalorder %s87, %s89
    %p93 = scmp.eq.s32.totalorder %s11, 0
    %p94 = por %p92, %p93
    %p95 = scmp.ne.s32.totalorder %s87, %s89
    %p96 = scmp.eq.s32.totalorder %s16, 1
    %p97 = por %p95, %p96
    %p98 = scmp.ne.s32.totalorder %s89, %s90
    %p99 = scmp.eq.s32.totalorder %s16, 0
    %p100 = por %p98, %p99
    %p101 = scmp.ne.s32.totalorder %s89, %s90
    %p102 = scmp.eq.s32.totalorder %s17, 1
    %p103 = por %p101, %p102
    %p105 = scmp.ne.s32.totalorder %s90, %s104
    %p106 = scmp.eq.s32.totalorder %s17, 0
    %p107 = por %p105, %p106
    %s109 = sadd.s32 %s108, 1
    %p112 = scmp.eq.s32.totalorder %s11, 1
    %p113 = scmp.ne.s32.totalorder %s108, %s110
    %p114 = scmp.eq.s32.totalorder %s11, 0
    %p115 = por %p113, %p114
    %p116 = scmp.ne.s32.totalorder %s108, %s110
    %p117 = scmp.eq.s32.totalorder %s16, 1
    %p118 = por %p116, %p117
    %p119 = scmp.ne.s32.totalorder %s110, %s111
    %p120 = scmp.eq.s32.totalorder %s16, 0
    %p121 = por %p119, %p120
    %p122 = scmp.ne.s32.totalorder %s110, %s111
    %p123 = scmp.eq.s32.totalorder %s17, 1
    %p124 = por %p122, %p123
    %p126 = scmp.ne.s32.totalorder %s111, %s125
    %p127 = scmp.eq.s32.totalorder %s17, 0
    %p128 = por %p126, %p127
    %s129 = ssub.s32 %s11, %s18
    %p130 = scmp.eq.s32.totalorder %s129, 0
    %s132 = sadd.s32 %s131, 1
    %s133 = scalar_select %p130, %s131, %s132
    %p136 = pneg %p130
    %p137 = scmp.eq.s32.totalorder %s11, 1
    %p138 = por %p136, %p137
    %p139 = scmp.ne.s32.totalorder %s131, %s134
    %p140 = scmp.eq.s32.totalorder %s11, 0
    %p141 = por %p139, %p140
    %p142 = scmp.ne.s32.totalorder %s131, %s134
    %p143 = scmp.eq.s32.totalorder %s16, 1
    %p144 = por %p142, %p143
    %p145 = scmp.ne.s32.totalorder %s134, %s135
    %p146 = scmp.eq.s32.totalorder %s16, 0
    %p147 = por %p145, %p146
    %p148 = scmp.ne.s32.totalorder %s134, %s135
    %p149 = scmp.eq.s32.totalorder %s17, 1
    %p150 = por %p148, %p149
    %p152 = scmp.ne.s32.totalorder %s135, %s151
    %p153 = scmp.eq.s32.totalorder %s17, 0
    %p154 = por %p152, %p153
    %p155 = scmp.le.s32.totalorder 1, %s11
    %p156 = scmp.lt.s32.totalorder %s11, 3
    %p157 = pnand %p155, %p156
    %p158 = pneg %p157
    // Predicated region
    $region9: #{resblk_basic_nhwc.1} parent=5 // pred_check
      _
    $region10: #{resblk_basic_nhwc.1} parent=5 // pred_check_branch
      %160 = sbr.rel (%p157) target = $region12
    $region11: #{resblk_basic_nhwc.1} parent=5 // pred_region
      %s161 = ssub.s32 %s11, 1
      // Predicated region
      $region13: #{resblk_basic_nhwc.1} parent=11 // pred_check
        %p162 = pneg %p58
      $region14: #{resblk_basic_nhwc.1} parent=11 // pred_check_branch
        %164 = sbr.rel (%p162) target = $region16
      $region15: #{resblk_basic_nhwc.1} parent=11 // pred_region
        _
      $region16: #{resblk_basic_nhwc.1} parent=11 // pred_fallthru
        _
      // Predicated region
      $region17: #{resblk_basic_nhwc.1} parent=11 // pred_check
        %p165 = pneg %p79
      $region18: #{resblk_basic_nhwc.1} parent=11 // pred_check_branch
        %167 = sbr.rel (%p165) target = $region20
      $region19: #{resblk_basic_nhwc.1} parent=11 // pred_region
        _
      $region20: #{resblk_basic_nhwc.1} parent=11 // pred_fallthru
        _
      // Predicated region
      $region21: #{resblk_basic_nhwc.1} parent=11 // pred_check
        %p168 = pneg %p100
      $region22: #{resblk_basic_nhwc.1} parent=11 // pred_check_branch
        %170 = sbr.rel (%p168) target = $region24
      $region23: #{resblk_basic_nhwc.1} parent=11 // pred_region
        _
      $region24: #{resblk_basic_nhwc.1} parent=11 // pred_fallthru
        _
      // Predicated region
      $region25: #{resblk_basic_nhwc.1} parent=11 // pred_check
        %p171 = pneg %p121
      $region26: #{resblk_basic_nhwc.1} parent=11 // pred_check_branch
        %173 = sbr.rel (%p171) target = $region28
      $region27: #{resblk_basic_nhwc.1} parent=11 // pred_region
        _
      $region28: #{resblk_basic_nhwc.1} parent=11 // pred_fallthru
        _
    $region12: #{resblk_basic_nhwc.1} parent=5 // pred_fallthru
      _
    %p174 = scmp.lt.s32.totalorder %s11, 2
    // Predicated region
    $region29: #{resblk_basic_nhwc.1} parent=5 // pred_check
      %p175 = pneg %p174
    $region30: #{resblk_basic_nhwc.1} parent=5 // pred_check_branch
      %177 = sbr.rel (%p175) target = $region32
    $region31: #{resblk_basic_nhwc.1} parent=5 // pred_region
      // Predicated region
      $region33: #{resblk_basic_nhwc.1} parent=31 // pred_check
        %p178 = pneg %p31
      $region34: #{resblk_basic_nhwc.1} parent=31 // pred_check_branch
        %180 = sbr.rel (%p178) target = $region36
      $region35: #{resblk_basic_nhwc.1} parent=31 // pred_region
        %s181 = smul.u32 16, %s11
        %p182 = scmp.lt.s32.totalorder %s181, 31
        %s183 = scalar_select %p182, %s181, 31
        %s184 = smul.addr %s183, 8
        %s185 = scalar_lea.vmem %s0, %s184
        %s186 = smul.u32 16, %s11
      $region36: #{resblk_basic_nhwc.1} parent=31 // pred_fallthru
        _
    $region32: #{resblk_basic_nhwc.1} parent=5 // pred_fallthru
      _
    %p187 = scmp.le.s32.totalorder 1, %s11
    %p188 = scmp.lt.s32.totalorder %s11, 3
    %p189 = pnand %p187, %p188
    %p190 = pneg %p189
    // Predicated region
    $region37: #{resblk_basic_nhwc.1} parent=5 // pred_check
      _
    $region38: #{resblk_basic_nhwc.1} parent=5 // pred_check_branch
      %192 = sbr.rel (%p189) target = $region40
    $region39: #{resblk_basic_nhwc.1} parent=5 // pred_region
      %s193 = ssub.s32 %s11, 1
      %s194 = smul.u32 16, %s16
      %p195 = scmp.lt.s32.totalorder %s194, 31
      %s196 = scalar_select %p195, %s194, 31
      %s197 = smul.addr %s196, 8
      %s198 = scalar_lea.vmem %s0, %s197
      %p199 = pneg %p37
      %p200 = pneg %p34
      %p201 = pneg %p58
      %p202 = pneg %p55
      %p203 = pneg %p79
      %p204 = pneg %p76
      %p205 = pneg %p100
      %p206 = pneg %p97
      %p207 = pneg %p121
      %p208 = pneg %p118
      %p209 = pneg %p147
      %p210 = pneg %p144
      %s211 = smul.u32 16, %s16
      %p212 = scmp.lt.s32.totalorder %s211, 31
      %s213 = scalar_select %p212, %s211, 31
      %s214 = smul.addr %s213, 8
      %s215 = scalar_lea.vmem %s5, %s214
      %s216 = smul.u32 16, %s16
      %p217 = scmp.lt.s32.totalorder %s216, 31
      %s218 = scalar_select %p217, %s216, 31
      %s219 = smul.addr %s218, 8
      %s220 = scalar_lea.vmem %s0, %s219
      %s221 = smul.u32 16, %s16
      %s222 = smul.u32 16, %s16
      %p223 = scmp.lt.s32.totalorder %s222, 31
      %s224 = scalar_select %p223, %s222, 31
      %s225 = smul.addr %s224, 8
      %s226 = scalar_lea.vmem %s5, %s225
      %s227 = smul.u32 16, %s16
      %v229 = vld [vmem:[%s220] sm:$0xff]
      %v230 = vld [vmem:[%s220 + $0x8] sm:$0xff]
      %v231 = vld [vmem:[%s220 + $0x10] sm:$0xff]
      %v232 = vld [vmem:[%s220 + $0x18] sm:$0xff]
      %v233 = vld [vmem:[%s220 + $0x20] sm:$0xff]
      %v234 = vld [vmem:[%s220 + $0x28] sm:$0xff]
      %v235 = vld [vmem:[%s220 + $0x30] sm:$0xff]
      %v236 = vld [vmem:[%s220 + $0x38] sm:$0xff]
      %v237 = vld [vmem:[%s220 + $0x40] sm:$0xff]
      %v238 = vld [vmem:[%s220 + $0x48] sm:$0xff]
      %v239 = vld [vmem:[%s220 + $0x50] sm:$0xff]
      %v240 = vld [vmem:[%s220 + $0x58] sm:$0xff]
      %v241 = vld [vmem:[%s220 + $0x60] sm:$0xff]
      %v242 = vld [vmem:[%s220 + $0x68] sm:$0xff]
      %v243 = vld [vmem:[%s220 + $0x70] sm:$0xff]
      %v244 = vld [vmem:[%s220 + $0x78] sm:$0xff]
      %v245 = vlaneseq
      %v246 = vshrl.u32 %v245, 7
      %v247 = vadd.s32 %v246, 8
      %v248 = vadd.s32 %v246, 16
      %v249 = vadd.s32 %v246, 24
      %v250 = vadd.s32 %v246, 32
      %v251 = vadd.s32 %v246, 40
      %v252 = vadd.s32 %v246, 48
      %v253 = vadd.s32 %v246, 56
      %v254 = vadd.s32 %v246, 64
      %v255 = vadd.s32 %v246, 72
      %v256 = vadd.s32 %v246, 80
      %v257 = vadd.s32 %v246, 88
      %v258 = vadd.s32 %v246, 96
      %v259 = vadd.s32 %v246, 104
      %v260 = vadd.s32 %v246, 112
      %v261 = vadd.s32 %v246, 120
      %vm262 = vcmp.lt.s32.totalorder %v246, 0
      %v263 = vsub.s32 0, %v246
      %v264 = vsel %vm262, %v263, %v246
      %v265 = vshrl.u32 %v264, 4
      %v266 = vand.u32 %v264, 15
      %v267 = vsub.s32 0, %v266
      %v268 = vsel %vm262, %v267, %v266
      %vm269 = vcmp.lt.s32.totalorder %v247, 0
      %v270 = vsub.s32 0, %v247
      %v271 = vsel %vm269, %v270, %v247
      %v272 = vshrl.u32 %v271, 4
      %v273 = vand.u32 %v271, 15
      %v274 = vsub.s32 0, %v273
      %v275 = vsel %vm269, %v274, %v273
      %vm276 = vcmp.lt.s32.totalorder %v248, 0
      %v277 = vsub.s32 0, %v248
      %v278 = vsel %vm276, %v277, %v248
      %v279 = vshrl.u32 %v278, 4
      %v280 = vand.u32 %v278, 15
      %v281 = vsub.s32 0, %v280
      %v282 = vsel %vm276, %v281, %v280
      %vm283 = vcmp.lt.s32.totalorder %v249, 0
      %v284 = vsub.s32 0, %v249
      %v285 = vsel %vm283, %v284, %v249
      %v286 = vshrl.u32 %v285, 4
      %v287 = vand.u32 %v285, 15
      %v288 = vsub.s32 0, %v287
      %v289 = vsel %vm283, %v288, %v287
      %vm290 = vcmp.lt.s32.totalorder %v250, 0
      %v291 = vsub.s32 0, %v250
      %v292 = vsel %vm290, %v291, %v250
      %v293 = vshrl.u32 %v292, 4
      %v294 = vand.u32 %v292, 15
      %v295 = vsub.s32 0, %v294
      %v296 = vsel %vm290, %v295, %v294
      %vm297 = vcmp.lt.s32.totalorder %v251, 0
      %v298 = vsub.s32 0, %v251
      %v299 = vsel %vm297, %v298, %v251
      %v300 = vshrl.u32 %v299, 4
      %v301 = vand.u32 %v299, 15
      %v302 = vsub.s32 0, %v301
      %v303 = vsel %vm297, %v302, %v301
      %vm304 = vcmp.lt.s32.totalorder %v252, 0
      %v305 = vsub.s32 0, %v252
      %v306 = vsel %vm304, %v305, %v252
      %v307 = vshrl.u32 %v306, 4
      %v308 = vand.u32 %v306, 15
      %v309 = vsub.s32 0, %v308
      %v310 = vsel %vm304, %v309, %v308
      %vm311 = vcmp.lt.s32.totalorder %v253, 0
      %v312 = vsub.s32 0, %v253
      %v313 = vsel %vm311, %v312, %v253
      %v314 = vshrl.u32 %v313, 4
      %v315 = vand.u32 %v313, 15
      %v316 = vsub.s32 0, %v315
      %v317 = vsel %vm311, %v316, %v315
      %vm318 = vcmp.lt.s32.totalorder %v254, 0
      %v319 = vsub.s32 0, %v254
      %v320 = vsel %vm318, %v319, %v254
      %v321 = vshrl.u32 %v320, 4
      %v322 = vand.u32 %v320, 15
      %v323 = vsub.s32 0, %v322
      %v324 = vsel %vm318, %v323, %v322
      %vm325 = vcmp.lt.s32.totalorder %v255, 0
      %v326 = vsub.s32 0, %v255
      %v327 = vsel %vm325, %v326, %v255
      %v328 = vshrl.u32 %v327, 4
      %v329 = vand.u32 %v327, 15
      %v330 = vsub.s32 0, %v329
      %v331 = vsel %vm325, %v330, %v329
      %vm332 = vcmp.lt.s32.totalorder %v256, 0
      %v333 = vsub.s32 0, %v256
      %v334 = vsel %vm332, %v333, %v256
      %v335 = vshrl.u32 %v334, 4
      %v336 = vand.u32 %v334, 15
      %v337 = vsub.s32 0, %v336
      %v338 = vsel %vm332, %v337, %v336
      %vm339 = vcmp.lt.s32.totalorder %v257, 0
      %v340 = vsub.s32 0, %v257
      %v341 = vsel %vm339, %v340, %v257
      %v342 = vshrl.u32 %v341, 4
      %v343 = vand.u32 %v341, 15
      %v344 = vsub.s32 0, %v343
      %v345 = vsel %vm339, %v344, %v343
      %vm346 = vcmp.lt.s32.totalorder %v258, 0
      %v347 = vsub.s32 0, %v258
      %v348 = vsel %vm346, %v347, %v258
      %v349 = vshrl.u32 %v348, 4
      %v350 = vand.u32 %v348, 15
      %v351 = vsub.s32 0, %v350
      %v352 = vsel %vm346, %v351, %v350
      %vm353 = vcmp.lt.s32.totalorder %v259, 0
      %v354 = vsub.s32 0, %v259
      %v355 = vsel %vm353, %v354, %v259
      %v356 = vshrl.u32 %v355, 4
      %v357 = vand.u32 %v355, 15
      %v358 = vsub.s32 0, %v357
      %v359 = vsel %vm353, %v358, %v357
      %vm360 = vcmp.lt.s32.totalorder %v260, 0
      %v361 = vsub.s32 0, %v260
      %v362 = vsel %vm360, %v361, %v260
      %v363 = vshrl.u32 %v362, 4
      %v364 = vand.u32 %v362, 15
      %v365 = vsub.s32 0, %v364
      %v366 = vsel %vm360, %v365, %v364
      %vm367 = vcmp.lt.s32.totalorder %v261, 0
      %v368 = vsub.s32 0, %v261
      %v369 = vsel %vm367, %v368, %v261
      %v370 = vshrl.u32 %v369, 4
      %v371 = vand.u32 %v369, 15
      %v372 = vsub.s32 0, %v371
      %v373 = vsel %vm367, %v372, %v371
      %vm374 = vcmp.ne.s32.totalorder %v268, 0
      %vm375 = vcmp.ne.s32.totalorder %v275, 0
      %vm376 = vcmp.ne.s32.totalorder %v282, 0
      %vm377 = vcmp.ne.s32.totalorder %v289, 0
      %vm378 = vcmp.ne.s32.totalorder %v296, 0
      %vm379 = vcmp.ne.s32.totalorder %v303, 0
      %vm380 = vcmp.ne.s32.totalorder %v310, 0
      %vm381 = vcmp.ne.s32.totalorder %v317, 0
      %vm382 = vcmp.ne.s32.totalorder %v324, 0
      %vm383 = vcmp.ne.s32.totalorder %v331, 0
      %vm384 = vcmp.ne.s32.totalorder %v338, 0
      %vm385 = vcmp.ne.s32.totalorder %v345, 0
      %vm386 = vcmp.ne.s32.totalorder %v352, 0
      %vm387 = vcmp.ne.s32.totalorder %v359, 0
      %vm388 = vcmp.ne.s32.totalorder %v366, 0
      %vm389 = vcmp.ne.s32.totalorder %v373, 0
      %vm390 = vcmp.lt.s32.totalorder %v268, 0
      %vm391 = vcmp.lt.s32.totalorder %v275, 0
      %vm392 = vcmp.lt.s32.totalorder %v282, 0
      %vm393 = vcmp.lt.s32.totalorder %v289, 0
      %vm394 = vcmp.lt.s32.totalorder %v296, 0
      %vm395 = vcmp.lt.s32.totalorder %v303, 0
      %vm396 = vcmp.lt.s32.totalorder %v310, 0
      %vm397 = vcmp.lt.s32.totalorder %v317, 0
      %vm398 = vcmp.lt.s32.totalorder %v324, 0
      %vm399 = vcmp.lt.s32.totalorder %v331, 0
      %vm400 = vcmp.lt.s32.totalorder %v338, 0
      %vm401 = vcmp.lt.s32.totalorder %v345, 0
      %vm402 = vcmp.lt.s32.totalorder %v352, 0
      %vm403 = vcmp.lt.s32.totalorder %v359, 0
      %vm404 = vcmp.lt.s32.totalorder %v366, 0
      %vm405 = vcmp.lt.s32.totalorder %v373, 0
      %vm406 = vmand %vm390, %vm374
      %vm407 = vmand %vm391, %vm375
      %vm408 = vmand %vm392, %vm376
      %vm409 = vmand %vm393, %vm377
      %vm410 = vmand %vm394, %vm378
      %vm411 = vmand %vm395, %vm379
      %vm412 = vmand %vm396, %vm380
      %vm413 = vmand %vm397, %vm381
      %vm414 = vmand %vm398, %vm382
      %vm415 = vmand %vm399, %vm383
      %vm416 = vmand %vm400, %vm384
      %vm417 = vmand %vm401, %vm385
      %vm418 = vmand %vm402, %vm386
      %vm419 = vmand %vm403, %vm387
      %vm420 = vmand %vm404, %vm388
      %vm421 = vmand %vm405, %vm389
      %v422 = vadd.s32 %v268, 16
      %v423 = vadd.s32 %v275, 16
      %v424 = vadd.s32 %v282, 16
      %v425 = vadd.s32 %v289, 16
      %v426 = vadd.s32 %v296, 16
      %v427 = vadd.s32 %v303, 16
      %v428 = vadd.s32 %v310, 16
      %v429 = vadd.s32 %v317, 16
      %v430 = vadd.s32 %v324, 16
      %v431 = vadd.s32 %v331, 16
      %v432 = vadd.s32 %v338, 16
      %v433 = vadd.s32 %v345, 16
      %v434 = vadd.s32 %v352, 16
      %v435 = vadd.s32 %v359, 16
      %v436 = vadd.s32 %v366, 16
      %v437 = vadd.s32 %v373, 16
      %v438 = vsel %vm406, %v422, %v268
      %v439 = vsel %vm407, %v423, %v275
      %v440 = vsel %vm408, %v424, %v282
      %v441 = vsel %vm409, %v425, %v289
      %v442 = vsel %vm410, %v426, %v296
      %v443 = vsel %vm411, %v427, %v303
      %v444 = vsel %vm412, %v428, %v310
      %v445 = vsel %vm413, %v429, %v317
      %v446 = vsel %vm414, %v430, %v324
      %v447 = vsel %vm415, %v431, %v331
      %v448 = vsel %vm416, %v432, %v338
      %v449 = vsel %vm417, %v433, %v345
      %v450 = vsel %vm418, %v434, %v352
      %v451 = vsel %vm419, %v435, %v359
      %v452 = vsel %vm420, %v436, %v366
      %v453 = vsel %vm421, %v437, %v373
      %v454 = vpack.c.bf16 %v230, %v229
      %v455 = vpack.c.bf16 %v232, %v231
      %v456 = vpack.c.bf16 %v234, %v233
      %v457 = vpack.c.bf16 %v236, %v235
      %v458 = vpack.c.bf16 %v238, %v237
      %v459 = vpack.c.bf16 %v240, %v239
      %v460 = vpack.c.bf16 %v242, %v241
      %v461 = vpack.c.bf16 %v244, %v243
      %v462 = vld [vmem:[%s1] sm:$0xff]
      %v463 = vld [vmem:[%s1 + $0x8] sm:$0xf]
      %v464 = vld [vmem:[%s1 + $0xc] sm:$0xff]
      %v465 = vld [vmem:[%s1 + $0x14] sm:$0xf]
      %v466 = vld [vmem:[%s1 + $0x18] sm:$0xff]
      %v467 = vld [vmem:[%s1 + $0x20] sm:$0xf]
      %v468 = vld [vmem:[%s1 + $0x24] sm:$0xff]
      %v469 = vld [vmem:[%s1 + $0x2c] sm:$0xf]
      %v470 = vld [vmem:[%s1 + $0x30] sm:$0xff]
      %v471 = vld [vmem:[%s1 + $0x38] sm:$0xf]
      %v472 = vld [vmem:[%s1 + $0x3c] sm:$0xff]
      %v473 = vld [vmem:[%s1 + $0x44] sm:$0xf]
      %v474 = vld [vmem:[%s1 + $0x48] sm:$0xff]
      %v475 = vld [vmem:[%s1 + $0x50] sm:$0xf]
      %v476 = vld [vmem:[%s1 + $0x54] sm:$0xff]
      %v477 = vld [vmem:[%s1 + $0x5c] sm:$0xf]
      %v478 = vld [vmem:[%s1 + $0x60] sm:$0xff]
      %v479 = vld [vmem:[%s1 + $0x68] sm:$0xf]
      %v480 = vld [vmem:[%s1 + $0x6c] sm:$0xff]
      %v481 = vld [vmem:[%s1 + $0x74] sm:$0xf]
      %v482 = vld [vmem:[%s1 + $0x78] sm:$0xff]
      %v483 = vld [vmem:[%s1 + $0x80] sm:$0xf]
      %v484 = vld [vmem:[%s1 + $0x84] sm:$0xff]
      %v485 = vld [vmem:[%s1 + $0x8c] sm:$0xf]
      %v486 = vld [vmem:[%s1 + $0x90] sm:$0xff]
      %v487 = vld [vmem:[%s1 + $0x98] sm:$0xf]
      %v488 = vld [vmem:[%s1 + $0x9c] sm:$0xff]
      %v489 = vld [vmem:[%s1 + $0xa4] sm:$0xf]
      %v490 = vld [vmem:[%s1 + $0xa8] sm:$0xff]
      %v491 = vld [vmem:[%s1 + $0xb0] sm:$0xf]
      %v492 = vld [vmem:[%s1 + $0xb4] sm:$0xff]
      %v493 = vld [vmem:[%s1 + $0xbc] sm:$0xf]
      %v526 = vunpack.c.l.b16 %v462
      %v527 = vunpack.c.h.b16 %v462
      %v528 = vunpack.c.l.b16 %v463
      %v529 = vunpack.c.l.b16 %v464
      %v530 = vunpack.c.h.b16 %v464
      %v531 = vunpack.c.l.b16 %v465
      %v532 = vunpack.c.l.b16 %v466
      %v533 = vunpack.c.h.b16 %v466
      %v534 = vunpack.c.l.b16 %v467
      %v535 = vunpack.c.l.b16 %v468
      %v536 = vunpack.c.h.b16 %v468
      %v537 = vunpack.c.l.b16 %v469
      %v538 = vunpack.c.l.b16 %v470
      %v539 = vunpack.c.h.b16 %v470
      %v540 = vunpack.c.l.b16 %v471
      %v541 = vunpack.c.l.b16 %v472
      %v542 = vunpack.c.h.b16 %v472
      %v543 = vunpack.c.l.b16 %v473
      %v544 = vunpack.c.l.b16 %v474
      %v545 = vunpack.c.h.b16 %v474
      %v546 = vunpack.c.l.b16 %v475
      %v547 = vunpack.c.l.b16 %v476
      %v548 = vunpack.c.h.b16 %v476
      %v549 = vunpack.c.l.b16 %v477
      %v550 = vunpack.c.l.b16 %v478
      %v551 = vunpack.c.h.b16 %v478
      %v552 = vunpack.c.l.b16 %v479
      %v553 = vunpack.c.l.b16 %v480
      %v554 = vunpack.c.h.b16 %v480
      %v555 = vunpack.c.l.b16 %v481
      %v556 = vunpack.c.l.b16 %v482
      %v557 = vunpack.c.h.b16 %v482
      %v558 = vunpack.c.l.b16 %v483
      %v559 = vunpack.c.l.b16 %v484
      %v560 = vunpack.c.h.b16 %v484
      %v561 = vunpack.c.l.b16 %v485
      %v562 = vunpack.c.l.b16 %v486
      %v563 = vunpack.c.h.b16 %v486
      %v564 = vunpack.c.l.b16 %v487
      %v565 = vunpack.c.l.b16 %v488
      %v566 = vunpack.c.h.b16 %v488
      %v567 = vunpack.c.l.b16 %v489
      %v568 = vunpack.c.l.b16 %v490
      %v569 = vunpack.c.h.b16 %v490
      %v570 = vunpack.c.l.b16 %v491
      %v571 = vunpack.c.l.b16 %v492
      %v572 = vunpack.c.h.b16 %v492
      %v573 = vunpack.c.l.b16 %v493
      %v574 = vpack.c.b16 %v529, %v526
      %v575 = vpack.c.b16 %v530, %v527
      %v576 = vpack.c.b16 %v531, %v528
      %v577 = vpack.c.b16 %v535, %v532
      %v578 = vpack.c.b16 %v536, %v533
      %v579 = vpack.c.b16 %v537, %v534
      %v580 = vpack.c.b16 %v541, %v538
      %v581 = vpack.c.b16 %v542, %v539
      %v582 = vpack.c.b16 %v543, %v540
      %v583 = vpack.c.b16 %v547, %v544
      %v584 = vpack.c.b16 %v548, %v545
      %v585 = vpack.c.b16 %v549, %v546
      %v586 = vpack.c.b16 %v553, %v550
      %v587 = vpack.c.b16 %v554, %v551
      %v588 = vpack.c.b16 %v555, %v552
      %v589 = vpack.c.b16 %v559, %v556
      %v590 = vpack.c.b16 %v560, %v557
      %v591 = vpack.c.b16 %v561, %v558
      %v592 = vpack.c.b16 %v565, %v562
      %v593 = vpack.c.b16 %v566, %v563
      %v594 = vpack.c.b16 %v567, %v564
      %v595 = vpack.c.b16 %v571, %v568
      %v596 = vpack.c.b16 %v572, %v569
      %v597 = vpack.c.b16 %v573, %v570
      %622 = vmatprep.subr.bf16.mxu0 %v575
      %623 = vmatpush1.bf16.msra.mxu0 %v574
      %624 = vmatprep.subr.bf16.mxu0 %v578
      %625 = vmatpush1.bf16.msra.mxu0 %v577
      %626 = vmatprep.subr.bf16.mxu0 %v581
      %627 = vmatpush1.bf16.msra.mxu0 %v580
      %628 = vmatprep.subr.bf16.mxu0 %v584
      %629 = vmatpush1.bf16.msra.mxu0 %v583
      %630 = vmatprep.subr.bf16.mxu0 %v587
      %631 = vmatpush1.bf16.msra.mxu0 %v586
      %632 = vmatprep.subr.bf16.mxu0 %v590
      %633 = vmatpush1.bf16.msra.mxu0 %v589
      %634 = vmatprep.subr.bf16.mxu0 %v593
      %635 = vmatpush1.bf16.msra.mxu0 %v592
      %636 = vmatprep.subr.bf16.mxu0 %v596
      %637 = vmatpush1.bf16.msra.mxu0 %v595
      %638 = vmatprep.subr.bf16.mxu0 0
      %639 = vmatpush1.bf16.msra.mxu0 0
      %640 = vmatprep.subr.bf16.mxu0 0
      %641 = vmatpush1.bf16.msra.mxu0 0
      %642 = vmatprep.subr.bf16.mxu0 0
      %643 = vmatpush1.bf16.msra.mxu0 0
      %644 = vmatprep.subr.bf16.mxu0 0
      %645 = vmatpush1.bf16.msra.mxu0 0
      %646 = vmatprep.subr.bf16.mxu0 0
      %647 = vmatpush1.bf16.msra.mxu0 0
      %648 = vmatprep.subr.bf16.mxu0 0
      %649 = vmatpush1.bf16.msra.mxu0 0
      %650 = vmatprep.subr.bf16.mxu0 0
      %651 = vmatpush1.bf16.msra.mxu0 0
      %652 = vmatprep.subr.bf16.mxu0 0
      %653 = vmatpush1.bf16.msra.mxu0 0
      %654 = vmatprep.mubr.bf16.mxu0 0
      %655 = vmatmul.mubr.bf16.gmra.mrb[0].mxu0 %v454
      %v656 = vpop.f32.mrb[0].mxu0
      %v657 = vadd.f32 0.0, %v656
      %v658 = vpop.f32.mrb[0].mxu0
      %v659 = vadd.f32 0.0, %v658
      %v660 = vpop.f32.mrb[0].mxu0
      %v661 = vadd.f32 0.0, %v660
      %v662 = vpop.f32.mrb[0].mxu0
      %v663 = vadd.f32 0.0, %v662
      %664 = vmatprep.mubr.bf16.mxu0 0
      %665 = vmatmul.mubr.bf16.gmra.mrb[0].mxu0 %v455
      %v666 = vpop.f32.mrb[0].mxu0
      %v667 = vadd.f32 0.0, %v666
      %v668 = vpop.f32.mrb[0].mxu0
      %v669 = vadd.f32 0.0, %v668
      %v670 = vpop.f32.mrb[0].mxu0
      %v671 = vadd.f32 0.0, %v670
      %v672 = vpop.f32.mrb[0].mxu0
      %v673 = vadd.f32 0.0, %v672
      %674 = vmatprep.mubr.bf16.mxu0 0
      %675 = vmatmul.mubr.bf16.gmra.mrb[0].mxu0 %v456
      %v676 = vpop.f32.mrb[0].mxu0
      %v677 = vadd.f32 0.0, %v676
      %v678 = vpop.f32.mrb[0].mxu0
      %v679 = vadd.f32 0.0, %v678
      %v680 = vpop.f32.mrb[0].mxu0
      %v681 = vadd.f32 0.0, %v680
      %v682 = vpop.f32.mrb[0].mxu0
      %v683 = vadd.f32 0.0, %v682
      %684 = vmatprep.mubr.bf16.mxu0 0
      %685 = vmatmul.mubr.bf16.gmra.mrb[0].mxu0 %v457
      %v686 = vpop.f32.mrb[0].mxu0
      %v687 = vadd.f32 0.0, %v686
      %v688 = vpop.f32.mrb[0].mxu0
      %v689 = vadd.f32 0.0, %v688
      %v690 = vpop.f32.mrb[0].mxu0
      %v691 = vadd.f32 0.0, %v690
      %v692 = vpop.f32.mrb[0].mxu0
      %v693 = vadd.f32 0.0, %v692
      %694 = vmatprep.mubr.bf16.mxu0 0
      %695 = vmatmul.mubr.bf16.gmra.mrb[0].mxu0 %v458
      %v696 = vpop.f32.mrb[0].mxu0
      %v697 = vadd.f32 0.0, %v696
      %v698 = vpop.f32.mrb[0].mxu0
      %v699 = vadd.f32 0.0, %v698
      %v700 = vpop.f32.mrb[0].mxu0
      %v701 = vadd.f32 0.0, %v700
      %v702 = vpop.f32.mrb[0].mxu0
      %v703 = vadd.f32 0.0, %v702
      %704 = vmatprep.mubr.bf16.mxu0 0
      %705 = vmatmul.mubr.bf16.gmra.mrb[0].mxu0 %v459
      %v706 = vpop.f32.mrb[0].mxu0
      %v707 = vadd.f32 0.0, %v706
      %v708 = vpop.f32.mrb[0].mxu0
      %v709 = vadd.f32 0.0, %v708
      %v710 = vpop.f32.mrb[0].mxu0
      %v711 = vadd.f32 0.0, %v710
      %v712 = vpop.f32.mrb[0].mxu0
      %v713 = vadd.f32 0.0, %v712
      %714 = vmatprep.mubr.bf16.mxu0 0
      %715 = vmatmul.mubr.bf16.gmra.mrb[0].mxu0 %v460
      %v716 = vpop.f32.mrb[0].mxu0
      %v717 = vadd.f32 0.0, %v716
      %v718 = vpop.f32.mrb[0].mxu0
      %v719 = vadd.f32 0.0, %v718
      %v720 = vpop.f32.mrb[0].mxu0
      %v721 = vadd.f32 0.0, %v720
      %v722 = vpop.f32.mrb[0].mxu0
      %v723 = vadd.f32 0.0, %v722
      %724 = vmatprep.mubr.bf16.mxu0 0
      %725 = vmatmul.mubr.bf16.gmra.mrb[0].mxu0 %v461
      %v726 = vpop.f32.mrb[0].mxu0
      %v727 = vadd.f32 0.0, %v726
      %v728 = vpop.f32.mrb[0].mxu0
      %v729 = vadd.f32 0.0, %v728
      %v730 = vpop.f32.mrb[0].mxu0
      %v731 = vadd.f32 0.0, %v730
      %v732 = vpop.f32.mrb[0].mxu0
      %v733 = vadd.f32 0.0, %v732
      %734 = vdwg.mxu0
      %735 = vmatprep.subr.bf16.mxu0 0
      %736 = vmatpush1.bf16.msra.mxu0 %v576
      %737 = vmatprep.subr.bf16.mxu0 0
      %738 = vmatpush1.bf16.msra.mxu0 %v579
      %739 = vmatprep.subr.bf16.mxu0 0
      %740 = vmatpush1.bf16.msra.mxu0 %v582
      %741 = vmatprep.subr.bf16.mxu0 0
      %742 = vmatpush1.bf16.msra.mxu0 %v585
      %743 = vmatprep.subr.bf16.mxu0 0
      %744 = vmatpush1.bf16.msra.mxu0 %v588
      %745 = vmatprep.subr.bf16.mxu0 0
      %746 = vmatpush1.bf16.msra.mxu0 %v591
      %747 = vmatprep.subr.bf16.mxu0 0
      %748 = vmatpush1.bf16.msra.mxu0 %v594
      %749 = vmatprep.subr.bf16.mxu0 0
      %750 = vmatpush1.bf16.msra.mxu0 %v597
      %751 = vmatprep.subr.bf16.mxu0 0
      %752 = vmatpush1.bf16.msra.mxu0 0
      %753 = vmatprep.subr.bf16.mxu0 0
      %754 = vmatpush1.bf16.msra.mxu0 0
      %755 = vmatprep.subr.bf16.mxu0 0
      %756 = vmatpush1.bf16.msra.mxu0 0
      %757 = vmatprep.subr.bf16.mxu0 0
      %758 = vmatpush1.bf16.msra.mxu0 0
      %759 = vmatprep.subr.bf16.mxu0 0
      %760 = vmatpush1.bf16.msra.mxu0 0
      %761 = vmatprep.subr.bf16.mxu0 0
      %762 = vmatpush1.bf16.msra.mxu0 0
      %763 = vmatprep.subr.bf16.mxu0 0
      %764 = vmatpush1.bf16.msra.mxu0 0
      %765 = vmatprep.subr.bf16.mxu0 0
      %766 = vmatpush1.bf16.msra.mxu0 0
      %767 = vmatprep.mubr.bf16.mxu0 0
      %768 = vmatmul.mubr.bf16.gmra.mrb[0].mxu0 %v454
      %v769 = vpop.f32.mrb[0].mxu0
      %v770 = vadd.f32 0.0, %v769
      %v771 = vpop.f32.mrb[0].mxu0
      %v772 = vpop.f32.mrb[0].mxu0
      %v773 = vadd.f32 0.0, %v772
      %v774 = vpop.f32.mrb[0].mxu0
      %775 = vmatprep.mubr.bf16.mxu0 0
      %776 = vmatmul.mubr.bf16.gmra.mrb[0].mxu0 %v455
      %v777 = vpop.f32.mrb[0].mxu0
      %v778 = vadd.f32 0.0, %v777
      %v779 = vpop.f32.mrb[0].mxu0
      %v780 = vpop.f32.mrb[0].mxu0
      %v781 = vadd.f32 0.0, %v780
      %v782 = vpop.f32.mrb[0].mxu0
      %783 = vmatprep.mubr.bf16.mxu0 0
      %784 = vmatmul.mubr.bf16.gmra.mrb[0].mxu0 %v456
      %v785 = vpop.f32.mrb[0].mxu0
      %v786 = vadd.f32 0.0, %v785
      %v787 = vpop.f32.mrb[0].mxu0
      %v788 = vpop.f32.mrb[0].mxu0
      %v789 = vadd.f32 0.0, %v788
      %v790 = vpop.f32.mrb[0].mxu0
      %791 = vmatprep.mubr.bf16.mxu0 0
      %792 = vmatmul.mubr.bf16.gmra.mrb[0].mxu0 %v457
      %v793 = vpop.f32.mrb[0].mxu0
      %v794 = vadd.f32 0.0, %v793
      %v795 = vpop.f32.mrb[0].mxu0
      %v796 = vpop.f32.mrb[0].mxu0
      %v797 = vadd.f32 0.0, %v796
      %v798 = vpop.f32.mrb[0].mxu0
      %799 = vmatprep.mubr.bf16.mxu0 0
      %800 = vmatmul.mubr.bf16.gmra.mrb[0].mxu0 %v458
      %v801 = vpop.f32.mrb[0].mxu0
      %v802 = vadd.f32 0.0, %v801
      %v803 = vpop.f32.mrb[0].mxu0
      %v804 = vpop.f32.mrb[0].mxu0
      %v805 = vadd.f32 0.0, %v804
      %v806 = vpop.f32.mrb[0].mxu0
      %807 = vmatprep.mubr.bf16.mxu0 0
      %808 = vmatmul.mubr.bf16.gmra.mrb[0].mxu0 %v459
      %v809 = vpop.f32.mrb[0].mxu0
      %v810 = vadd.f32 0.0, %v809
      %v811 = vpop.f32.mrb[0].mxu0
      %v812 = vpop.f32.mrb[0].mxu0
      %v813 = vadd.f32 0.0, %v812
      %v814 = vpop.f32.mrb[0].mxu0
      %815 = vmatprep.mubr.bf16.mxu0 0
      %816 = vmatmul.mubr.bf16.gmra.mrb[0].mxu0 %v460
      %v817 = vpop.f32.mrb[0].mxu0
      %v818 = vadd.f32 0.0, %v817
      %v819 = vpop.f32.mrb[0].mxu0
      %v820 = vpop.f32.mrb[0].mxu0
      %v821 = vadd.f32 0.0, %v820
      %v822 = vpop.f32.mrb[0].mxu0
      %823 = vmatprep.mubr.bf16.mxu0 0
      %824 = vmatmul.mubr.bf16.gmra.mrb[0].mxu0 %v461
      %v825 = vpop.f32.mrb[0].mxu0
      %v826 = vadd.f32 0.0, %v825
      %v827 = vpop.f32.mrb[0].mxu0
      %v828 = vpop.f32.mrb[0].mxu0
      %v829 = vadd.f32 0.0, %v828
      %v830 = vpop.f32.mrb[0].mxu0
      %831 = vdwg.mxu0
      %vm832 = vcmp.ge.s32.totalorder %v438, 1
      %vm833 = vcmp.ge.s32.totalorder %v439, 1
      %vm834 = vcmp.ge.s32.totalorder %v440, 1
      %vm835 = vcmp.ge.s32.totalorder %v441, 1
      %vm836 = vcmp.ge.s32.totalorder %v442, 1
      %vm837 = vcmp.ge.s32.totalorder %v443, 1
      %vm838 = vcmp.ge.s32.totalorder %v444, 1
      %vm839 = vcmp.ge.s32.totalorder %v445, 1
      %vm840 = vcmp.ge.s32.totalorder %v446, 1
      %vm841 = vcmp.ge.s32.totalorder %v447, 1
      %vm842 = vcmp.ge.s32.totalorder %v448, 1
      %vm843 = vcmp.ge.s32.totalorder %v449, 1
      %vm844 = vcmp.ge.s32.totalorder %v450, 1
      %vm845 = vcmp.ge.s32.totalorder %v451, 1
      %vm846 = vcmp.ge.s32.totalorder %v452, 1
      %vm847 = vcmp.ge.s32.totalorder %v453, 1
      %v848 = vrot.slane %v657, 7
      %v849 = vrot.slane %v661, 7
      %v850 = vrot.slane %v667, 7
      %v851 = vrot.slane %v671, 7
      %v852 = vrot.slane %v677, 7
      %v853 = vrot.slane %v681, 7
      %v854 = vrot.slane %v687, 7
      %v855 = vrot.slane %v691, 7
      %v856 = vrot.slane %v697, 7
      %v857 = vrot.slane %v701, 7
      %v858 = vrot.slane %v707, 7
      %v859 = vrot.slane %v711, 7
      %v860 = vrot.slane %v717, 7
      %v861 = vrot.slane %v721, 7
      %v862 = vrot.slane %v727, 7
      %v863 = vrot.slane %v731, 7
      %vm864 = vcmp.lt.s32.totalorder %v246, 1
      %v865 = vsel %vm864, %v862, %v863
      %v866 = vsel %vm864, %v861, %v862
      %v867 = vsel %vm864, %v860, %v861
      %v868 = vsel %vm864, %v859, %v860
      %v869 = vsel %vm864, %v858, %v859
      %v870 = vsel %vm864, %v857, %v858
      %v871 = vsel %vm864, %v856, %v857
      %v872 = vsel %vm864, %v855, %v856
      %v873 = vsel %vm864, %v854, %v855
      %v874 = vsel %vm864, %v853, %v854
      %v875 = vsel %vm864, %v852, %v853
      %v876 = vsel %vm864, %v851, %v852
      %v877 = vsel %vm864, %v850, %v851
      %v878 = vsel %vm864, %v849, %v850
      %v879 = vsel %vm864, %v848, %v849
      %v880 = vsel %vm864, %v863, %v848
      %v881 = vsel %vm832, 1, 0
      %v882 = vsel %vm833, 1, 0
      %v883 = vsel %vm834, 1, 0
      %v884 = vsel %vm835, 1, 0
      %v885 = vsel %vm836, 1, 0
      %v886 = vsel %vm837, 1, 0
      %v887 = vsel %vm838, 1, 0
      %v888 = vsel %vm839, 1, 0
      %v889 = vsel %vm840, 1, 0
      %v890 = vsel %vm841, 1, 0
      %v891 = vsel %vm842, 1, 0
      %v892 = vsel %vm843, 1, 0
      %v893 = vsel %vm844, 1, 0
      %v894 = vsel %vm845, 1, 0
      %v895 = vsel %vm846, 1, 0
      %v896 = vsel %vm847, 1, 0
      %vm897 = vcmp.eq.s32.totalorder %v881, 1
      %vm898 = vcmp.eq.s32.totalorder %v882, 1
      %vm899 = vcmp.eq.s32.totalorder %v883, 1
      %vm900 = vcmp.eq.s32.totalorder %v884, 1
      %vm901 = vcmp.eq.s32.totalorder %v885, 1
      %vm902 = vcmp.eq.s32.totalorder %v886, 1
      %vm903 = vcmp.eq.s32.totalorder %v887, 1
      %vm904 = vcmp.eq.s32.totalorder %v888, 1
      %vm905 = vcmp.eq.s32.totalorder %v889, 1
      %vm906 = vcmp.eq.s32.totalorder %v890, 1
      %vm907 = vcmp.eq.s32.totalorder %v891, 1
      %vm908 = vcmp.eq.s32.totalorder %v892, 1
      %vm909 = vcmp.eq.s32.totalorder %v893, 1
      %vm910 = vcmp.eq.s32.totalorder %v894, 1
      %vm911 = vcmp.eq.s32.totalorder %v895, 1
      %vm912 = vcmp.eq.s32.totalorder %v896, 1
      %v913 = vsel %vm897, %v880, 0.0
      %v914 = vsel %vm898, %v879, 0.0
      %v915 = vsel %vm899, %v878, 0.0
      %v916 = vsel %vm900, %v877, 0.0
      %v917 = vsel %vm901, %v876, 0.0
      %v918 = vsel %vm902, %v875, 0.0
      %v919 = vsel %vm903, %v874, 0.0
      %v920 = vsel %vm904, %v873, 0.0
      %v921 = vsel %vm905, %v872, 0.0
      %v922 = vsel %vm906, %v871, 0.0
      %v923 = vsel %vm907, %v870, 0.0
      %v924 = vsel %vm908, %v869, 0.0
      %v925 = vsel %vm909, %v868, 0.0
      %v926 = vsel %vm910, %v867, 0.0
      %v927 = vsel %vm911, %v866, 0.0
      %v928 = vsel %vm912, %v865, 0.0
      %v929 = vadd.f32 %v659, %v913
      %v930 = vadd.f32 %v663, %v914
      %v931 = vadd.f32 %v669, %v915
      %v932 = vadd.f32 %v673, %v916
      %v933 = vadd.f32 %v679, %v917
      %v934 = vadd.f32 %v683, %v918
      %v935 = vadd.f32 %v689, %v919
      %v936 = vadd.f32 %v693, %v920
      %v937 = vadd.f32 %v699, %v921
      %v938 = vadd.f32 %v703, %v922
      %v939 = vadd.f32 %v709, %v923
      %v940 = vadd.f32 %v713, %v924
      %v941 = vadd.f32 %v719, %v925
      %v942 = vadd.f32 %v723, %v926
      %v943 = vadd.f32 %v729, %v927
      %v944 = vadd.f32 %v733, %v928
      %vm945 = vcmp.le.s32.totalorder %v438, 14
      %vm946 = vcmp.le.s32.totalorder %v439, 14
      %vm947 = vcmp.le.s32.totalorder %v440, 14
      %vm948 = vcmp.le.s32.totalorder %v441, 14
      %vm949 = vcmp.le.s32.totalorder %v442, 14
      %vm950 = vcmp.le.s32.totalorder %v443, 14
      %vm951 = vcmp.le.s32.totalorder %v444, 14
      %vm952 = vcmp.le.s32.totalorder %v445, 14
      %vm953 = vcmp.le.s32.totalorder %v446, 14
      %vm954 = vcmp.le.s32.totalorder %v447, 14
      %vm955 = vcmp.le.s32.totalorder %v448, 14
      %vm956 = vcmp.le.s32.totalorder %v449, 14
      %vm957 = vcmp.le.s32.totalorder %v450, 14
      %vm958 = vcmp.le.s32.totalorder %v451, 14
      %vm959 = vcmp.le.s32.totalorder %v452, 14
      %vm960 = vcmp.le.s32.totalorder %v453, 14
      %v961 = vrot.slane %v770, 1
      %v962 = vrot.slane %v773, 1
      %v963 = vrot.slane %v778, 1
      %v964 = vrot.slane %v781, 1
      %v965 = vrot.slane %v786, 1
      %v966 = vrot.slane %v789, 1
      %v967 = vrot.slane %v794, 1
      %v968 = vrot.slane %v797, 1
      %v969 = vrot.slane %v802, 1
      %v970 = vrot.slane %v805, 1
      %v971 = vrot.slane %v810, 1
      %v972 = vrot.slane %v813, 1
      %v973 = vrot.slane %v818, 1
      %v974 = vrot.slane %v821, 1
      %v975 = vrot.slane %v826, 1
      %v976 = vrot.slane %v829, 1
      %vm977 = vcmp.lt.s32.totalorder %v246, 7
      %v978 = vsel %vm977, %v975, %v976
      %v979 = vsel %vm977, %v974, %v975
      %v980 = vsel %vm977, %v973, %v974
      %v981 = vsel %vm977, %v972, %v973
      %v982 = vsel %vm977, %v971, %v972
      %v983 = vsel %vm977, %v970, %v971
      %v984 = vsel %vm977, %v969, %v970
      %v985 = vsel %vm977, %v968, %v969
      %v986 = vsel %vm977, %v967, %v968
      %v987 = vsel %vm977, %v966, %v967
      %v988 = vsel %vm977, %v965, %v966
      %v989 = vsel %vm977, %v964, %v965
      %v990 = vsel %vm977, %v963, %v964
      %v991 = vsel %vm977, %v962, %v963
      %v992 = vsel %vm977, %v961, %v962
      %v993 = vsel %vm977, %v976, %v961
      %v994 = vsel %vm945, 1, 0
      %v995 = vsel %vm946, 1, 0
      %v996 = vsel %vm947, 1, 0
      %v997 = vsel %vm948, 1, 0
      %v998 = vsel %vm949, 1, 0
      %v999 = vsel %vm950, 1, 0
      %v1000 = vsel %vm951, 1, 0
      %v1001 = vsel %vm952, 1, 0
      %v1002 = vsel %vm953, 1, 0
      %v1003 = vsel %vm954, 1, 0
      %v1004 = vsel %vm955, 1, 0
      %v1005 = vsel %vm956, 1, 0
      %v1006 = vsel %vm957, 1, 0
      %v1007 = vsel %vm958, 1, 0
      %v1008 = vsel %vm959, 1, 0
      %v1009 = vsel %vm960, 1, 0
      %vm1010 = vcmp.eq.s32.totalorder %v994, 1
      %vm1011 = vcmp.eq.s32.totalorder %v995, 1
      %vm1012 = vcmp.eq.s32.totalorder %v996, 1
      %vm1013 = vcmp.eq.s32.totalorder %v997, 1
      %vm1014 = vcmp.eq.s32.totalorder %v998, 1
      %vm1015 = vcmp.eq.s32.totalorder %v999, 1
      %vm1016 = vcmp.eq.s32.totalorder %v1000, 1
      %vm1017 = vcmp.eq.s32.totalorder %v1001, 1
      %vm1018 = vcmp.eq.s32.totalorder %v1002, 1
      %vm1019 = vcmp.eq.s32.totalorder %v1003, 1
      %vm1020 = vcmp.eq.s32.totalorder %v1004, 1
      %vm1021 = vcmp.eq.s32.totalorder %v1005, 1
      %vm1022 = vcmp.eq.s32.totalorder %v1006, 1
      %vm1023 = vcmp.eq.s32.totalorder %v1007, 1
      %vm1024 = vcmp.eq.s32.totalorder %v1008, 1
      %vm1025 = vcmp.eq.s32.totalorder %v1009, 1
      %v1026 = vsel %vm1010, %v992, 0.0
      %v1027 = vsel %vm1011, %v991, 0.0
      %v1028 = vsel %vm1012, %v990, 0.0
      %v1029 = vsel %vm1013, %v989, 0.0
      %v1030 = vsel %vm1014, %v988, 0.0
      %v1031 = vsel %vm1015, %v987, 0.0
      %v1032 = vsel %vm1016, %v986, 0.0
      %v1033 = vsel %vm1017, %v985, 0.0
      %v1034 = vsel %vm1018, %v984, 0.0
      %v1035 = vsel %vm1019, %v983, 0.0
      %v1036 = vsel %vm1020, %v982, 0.0
      %v1037 = vsel %vm1021, %v981, 0.0
      %v1038 = vsel %vm1022, %v980, 0.0
      %v1039 = vsel %vm1023, %v979, 0.0
      %v1040 = vsel %vm1024, %v978, 0.0
      %v1041 = vsel %vm1025, %v993, 0.0
      %v1042 = vadd.f32 %v929, %v1026
      %v1043 = vadd.f32 %v930, %v1027
      %v1044 = vadd.f32 %v931, %v1028
      %v1045 = vadd.f32 %v932, %v1029
      %v1046 = vadd.f32 %v933, %v1030
      %v1047 = vadd.f32 %v934, %v1031
      %v1048 = vadd.f32 %v935, %v1032
      %v1049 = vadd.f32 %v936, %v1033
      %v1050 = vadd.f32 %v937, %v1034
      %v1051 = vadd.f32 %v938, %v1035
      %v1052 = vadd.f32 %v939, %v1036
      %v1053 = vadd.f32 %v940, %v1037
      %v1054 = vadd.f32 %v941, %v1038
      %v1055 = vadd.f32 %v942, %v1039
      %v1056 = vadd.f32 %v943, %v1040
      %v1057 = vadd.f32 %v944, %v1041
      %v1058 = vld [vmem:[%s3] sm:$0x1]
      %v1060 = vlaneseq
      %v1061 = vshrl.u32 %v1060, 7
      %v1062 = vsub.s32 0, %v1061
      %v1063 = vrot.slane %v1058, %v1062
      %v1065 = vadd.f32 %v1042, %v1063
      %v1066 = vadd.f32 %v1043, %v1063
      %v1067 = vadd.f32 %v1044, %v1063
      %v1068 = vadd.f32 %v1045, %v1063
      %v1069 = vadd.f32 %v1046, %v1063
      %v1070 = vadd.f32 %v1047, %v1063
      %v1071 = vadd.f32 %v1048, %v1063
      %v1072 = vadd.f32 %v1049, %v1063
      %v1073 = vadd.f32 %v1050, %v1063
      %v1074 = vadd.f32 %v1051, %v1063
      %v1075 = vadd.f32 %v1052, %v1063
      %v1076 = vadd.f32 %v1053, %v1063
      %v1077 = vadd.f32 %v1054, %v1063
      %v1078 = vadd.f32 %v1055, %v1063
      %v1079 = vadd.f32 %v1056, %v1063
      %v1080 = vadd.f32 %v1057, %v1063
      %v1081 = vmax.f32 %v1065, 0.0
      %v1082 = vmax.f32 %v1066, 0.0
      %v1083 = vmax.f32 %v1067, 0.0
      %v1084 = vmax.f32 %v1068, 0.0
      %v1085 = vmax.f32 %v1069, 0.0
      %v1086 = vmax.f32 %v1070, 0.0
      %v1087 = vmax.f32 %v1071, 0.0
      %v1088 = vmax.f32 %v1072, 0.0
      %v1089 = vmax.f32 %v1073, 0.0
      %v1090 = vmax.f32 %v1074, 0.0
      %v1091 = vmax.f32 %v1075, 0.0
      %v1092 = vmax.f32 %v1076, 0.0
      %v1093 = vmax.f32 %v1077, 0.0
      %v1094 = vmax.f32 %v1078, 0.0
      %v1095 = vmax.f32 %v1079, 0.0
      %v1096 = vmax.f32 %v1080, 0.0
      %v1097 = vpack.c.bf16 %v1082, %v1081
      %v1098 = vpack.c.bf16 %v1084, %v1083
      %v1099 = vpack.c.bf16 %v1086, %v1085
      %v1100 = vpack.c.bf16 %v1088, %v1087
      %v1101 = vpack.c.bf16 %v1090, %v1089
      %v1102 = vpack.c.bf16 %v1092, %v1091
      %v1103 = vpack.c.bf16 %v1094, %v1093
      %v1104 = vpack.c.bf16 %v1096, %v1095
      %v1105 = vld [vmem:[%s2] sm:$0xff]
      %v1106 = vld [vmem:[%s2 + $0x8] sm:$0xf]
      %v1107 = vld [vmem:[%s2 + $0xc] sm:$0xff]
      %v1108 = vld [vmem:[%s2 + $0x14] sm:$0xf]
      %v1109 = vld [vmem:[%s2 + $0x18] sm:$0xff]
      %v1110 = vld [vmem:[%s2 + $0x20] sm:$0xf]
      %v1111 = vld [vmem:[%s2 + $0x24] sm:$0xff]
      %v1112 = vld [vmem:[%s2 + $0x2c] sm:$0xf]
      %v1113 = vld [vmem:[%s2 + $0x30] sm:$0xff]
      %v1114 = vld [vmem:[%s2 + $0x38] sm:$0xf]
      %v1115 = vld [vmem:[%s2 + $0x3c] sm:$0xff]
      %v1116 = vld [vmem:[%s2 + $0x44] sm:$0xf]
      %v1117 = vld [vmem:[%s2 + $0x48] sm:$0xff]
      %v1118 = vld [vmem:[%s2 + $0x50] sm:$0xf]
      %v1119 = vld [vmem:[%s2 + $0x54] sm:$0xff]
      %v1120 = vld [vmem:[%s2 + $0x5c] sm:$0xf]
      %v1121 = vld [vmem:[%s2 + $0x60] sm:$0xff]
      %v1122 = vld [vmem:[%s2 + $0x68] sm:$0xf]
      %v1123 = vld [vmem:[%s2 + $0x6c] sm:$0xff]
      %v1124 = vld [vmem:[%s2 + $0x74] sm:$0xf]
      %v1125 = vld [vmem:[%s2 + $0x78] sm:$0xff]
      %v1126 = vld [vmem:[%s2 + $0x80] sm:$0xf]
      %v1127 = vld [vmem:[%s2 + $0x84] sm:$0xff]
      %v1128 = vld [vmem:[%s2 + $0x8c] sm:$0xf]
      %v1129 = vld [vmem:[%s2 + $0x90] sm:$0xff]
      %v1130 = vld [vmem:[%s2 + $0x98] sm:$0xf]
      %v1131 = vld [vmem:[%s2 + $0x9c] sm:$0xff]
      %v1132 = vld [vmem:[%s2 + $0xa4] sm:$0xf]
      %v1133 = vld [vmem:[%s2 + $0xa8] sm:$0xff]
      %v1134 = vld [vmem:[%s2 + $0xb0] sm:$0xf]
      %v1135 = vld [vmem:[%s2 + $0xb4] sm:$0xff]
      %v1136 = vld [vmem:[%s2 + $0xbc] sm:$0xf]
      %v1169 = vunpack.c.l.b16 %v1105
      %v1170 = vunpack.c.h.b16 %v1105
      %v1171 = vunpack.c.l.b16 %v1106
      %v1172 = vunpack.c.l.b16 %v1107
      %v1173 = vunpack.c.h.b16 %v1107
      %v1174 = vunpack.c.l.b16 %v1108
      %v1175 = vunpack.c.l.b16 %v1109
      %v1176 = vunpack.c.h.b16 %v1109
      %v1177 = vunpack.c.l.b16 %v1110
      %v1178 = vunpack.c.l.b16 %v1111
      %v1179 = vunpack.c.h.b16 %v1111
      %v1180 = vunpack.c.l.b16 %v1112
      %v1181 = vunpack.c.l.b16 %v1113
      %v1182 = vunpack.c.h.b16 %v1113
      %v1183 = vunpack.c.l.b16 %v1114
      %v1184 = vunpack.c.l.b16 %v1115
      %v1185 = vunpack.c.h.b16 %v1115
      %v1186 = vunpack.c.l.b16 %v1116
      %v1187 = vunpack.c.l.b16 %v1117
      %v1188 = vunpack.c.h.b16 %v1117
      %v1189 = vunpack.c.l.b16 %v1118
      %v1190 = vunpack.c.l.b16 %v1119
      %v1191 = vunpack.c.h.b16 %v1119
      %v1192 = vunpack.c.l.b16 %v1120
      %v1193 = vunpack.c.l.b16 %v1121
      %v1194 = vunpack.c.h.b16 %v1121
      %v1195 = vunpack.c.l.b16 %v1122
      %v1196 = vunpack.c.l.b16 %v1123
      %v1197 = vunpack.c.h.b16 %v1123
      %v1198 = vunpack.c.l.b16 %v1124
      %v1199 = vunpack.c.l.b16 %v1125
      %v1200 = vunpack.c.h.b16 %v1125
      %v1201 = vunpack.c.l.b16 %v1126
      %v1202 = vunpack.c.l.b16 %v1127
      %v1203 = vunpack.c.h.b16 %v1127
      %v1204 = vunpack.c.l.b16 %v1128
      %v1205 = vunpack.c.l.b16 %v1129
      %v1206 = vunpack.c.h.b16 %v1129
      %v1207 = vunpack.c.l.b16 %v1130
      %v1208 = vunpack.c.l.b16 %v1131
      %v1209 = vunpack.c.h.b16 %v1131
      %v1210 = vunpack.c.l.b16 %v1132
      %v1211 = vunpack.c.l.b16 %v1133
      %v1212 = vunpack.c.h.b16 %v1133
      %v1213 = vunpack.c.l.b16 %v1134
      %v1214 = vunpack.c.l.b16 %v1135
      %v1215 = vunpack.c.h.b16 %v1135
      %v1216 = vunpack.c.l.b16 %v1136
      %v1217 = vpack.c.b16 %v1172, %v1169
      %v1218 = vpack.c.b16 %v1173, %v1170
      %v1219 = vpack.c.b16 %v1174, %v1171
      %v1220 = vpack.c.b16 %v1178, %v1175
      %v1221 = vpack.c.b16 %v1179, %v1176
      %v1222 = vpack.c.b16 %v1180, %v1177
      %v1223 = vpack.c.b16 %v1184, %v1181
      %v1224 = vpack.c.b16 %v1185, %v1182
      %v1225 = vpack.c.b16 %v1186, %v1183
      %v1226 = vpack.c.b16 %v1190, %v1187
      %v1227 = vpack.c.b16 %v1191, %v1188
      %v1228 = vpack.c.b16 %v1192, %v1189
      %v1229 = vpack.c.b16 %v1196, %v1193
      %v1230 = vpack.c.b16 %v1197, %v1194
      %v1231 = vpack.c.b16 %v1198, %v1195
      %v1232 = vpack.c.b16 %v1202, %v1199
      %v1233 = vpack.c.b16 %v1203, %v1200
      %v1234 = vpack.c.b16 %v1204, %v1201
      %v1235 = vpack.c.b16 %v1208, %v1205
      %v1236 = vpack.c.b16 %v1209, %v1206
      %v1237 = vpack.c.b16 %v1210, %v1207
      %v1238 = vpack.c.b16 %v1214, %v1211
      %v1239 = vpack.c.b16 %v1215, %v1212
      %v1240 = vpack.c.b16 %v1216, %v1213
      %1265 = vmatprep.subr.bf16.mxu0 %v1218
      %1266 = vmatpush1.bf16.msra.mxu0 %v1217
      %1267 = vmatprep.subr.bf16.mxu0 %v1221
      %1268 = vmatpush1.bf16.msra.mxu0 %v1220
      %1269 = vmatprep.subr.bf16.mxu0 %v1224
      %1270 = vmatpush1.bf16.msra.mxu0 %v1223
      %1271 = vmatprep.subr.bf16.mxu0 %v1227
      %1272 = vmatpush1.bf16.msra.mxu0 %v1226
      %1273 = vmatprep.subr.bf16.mxu0 %v1230
      %1274 = vmatpush1.bf16.msra.mxu0 %v1229
      %1275 = vmatprep.subr.bf16.mxu0 %v1233
      %1276 = vmatpush1.bf16.msra.mxu0 %v1232
      %1277 = vmatprep.subr.bf16.mxu0 %v1236
      %1278 = vmatpush1.bf16.msra.mxu0 %v1235
      %1279 = vmatprep.subr.bf16.mxu0 %v1239
      %1280 = vmatpush1.bf16.msra.mxu0 %v1238
      %1281 = vmatprep.subr.bf16.mxu0 0
      %1282 = vmatpush1.bf16.msra.mxu0 0
      %1283 = vmatprep.subr.bf16.mxu0 0
      %1284 = vmatpush1.bf16.msra.mxu0 0
      %1285 = vmatprep.subr.bf16.mxu0 0
      %1286 = vmatpush1.bf16.msra.mxu0 0
      %1287 = vmatprep.subr.bf16.mxu0 0
      %1288 = vmatpush1.bf16.msra.mxu0 0
      %1289 = vmatprep.subr.bf16.mxu0 0
      %1290 = vmatpush1.bf16.msra.mxu0 0
      %1291 = vmatprep.subr.bf16.mxu0 0
      %1292 = vmatpush1.bf16.msra.mxu0 0
      %1293 = vmatprep.subr.bf16.mxu0 0
      %1294 = vmatpush1.bf16.msra.mxu0 0
      %1295 = vmatprep.subr.bf16.mxu0 0
      %1296 = vmatpush1.bf16.msra.mxu0 0
      %1297 = vmatprep.mubr.bf16.mxu0 0
      %1298 = vmatmul.mubr.bf16.gmra.mrb[0].mxu0 %v1097
      %v1299 = vpop.f32.mrb[0].mxu0
      %v1300 = vadd.f32 0.0, %v1299
      %v1301 = vpop.f32.mrb[0].mxu0
      %v1302 = vadd.f32 0.0, %v1301
      %v1303 = vpop.f32.mrb[0].mxu0
      %v1304 = vadd.f32 0.0, %v1303
      %v1305 = vpop.f32.mrb[0].mxu0
      %v1306 = vadd.f32 0.0, %v1305
      %1307 = vmatprep.mubr.bf16.mxu0 0
      %1308 = vmatmul.mubr.bf16.gmra.mrb[0].mxu0 %v1098
      %v1309 = vpop.f32.mrb[0].mxu0
      %v1310 = vadd.f32 0.0, %v1309
      %v1311 = vpop.f32.mrb[0].mxu0
      %v1312 = vadd.f32 0.0, %v1311
      %v1313 = vpop.f32.mrb[0].mxu0
      %v1314 = vadd.f32 0.0, %v1313
      %v1315 = vpop.f32.mrb[0].mxu0
      %v1316 = vadd.f32 0.0, %v1315
      %1317 = vmatprep.mubr.bf16.mxu0 0
      %1318 = vmatmul.mubr.bf16.gmra.mrb[0].mxu0 %v1099
      %v1319 = vpop.f32.mrb[0].mxu0
      %v1320 = vadd.f32 0.0, %v1319
      %v1321 = vpop.f32.mrb[0].mxu0
      %v1322 = vadd.f32 0.0, %v1321
      %v1323 = vpop.f32.mrb[0].mxu0
      %v1324 = vadd.f32 0.0, %v1323
      %v1325 = vpop.f32.mrb[0].mxu0
      %v1326 = vadd.f32 0.0, %v1325
      %1327 = vmatprep.mubr.bf16.mxu0 0
      %1328 = vmatmul.mubr.bf16.gmra.mrb[0].mxu0 %v1100
      %v1329 = vpop.f32.mrb[0].mxu0
      %v1330 = vadd.f32 0.0, %v1329
      %v1331 = vpop.f32.mrb[0].mxu0
      %v1332 = vadd.f32 0.0, %v1331
      %v1333 = vpop.f32.mrb[0].mxu0
      %v1334 = vadd.f32 0.0, %v1333
      %v1335 = vpop.f32.mrb[0].mxu0
      %v1336 = vadd.f32 0.0, %v1335
      %1337 = vmatprep.mubr.bf16.mxu0 0
      %1338 = vmatmul.mubr.bf16.gmra.mrb[0].mxu0 %v1101
      %v1339 = vpop.f32.mrb[0].mxu0
      %v1340 = vadd.f32 0.0, %v1339
      %v1341 = vpop.f32.mrb[0].mxu0
      %v1342 = vadd.f32 0.0, %v1341
      %v1343 = vpop.f32.mrb[0].mxu0
      %v1344 = vadd.f32 0.0, %v1343
      %v1345 = vpop.f32.mrb[0].mxu0
      %v1346 = vadd.f32 0.0, %v1345
      %1347 = vmatprep.mubr.bf16.mxu0 0
      %1348 = vmatmul.mubr.bf16.gmra.mrb[0].mxu0 %v1102
      %v1349 = vpop.f32.mrb[0].mxu0
      %v1350 = vadd.f32 0.0, %v1349
      %v1351 = vpop.f32.mrb[0].mxu0
      %v1352 = vadd.f32 0.0, %v1351
      %v1353 = vpop.f32.mrb[0].mxu0
      %v1354 = vadd.f32 0.0, %v1353
      %v1355 = vpop.f32.mrb[0].mxu0
      %v1356 = vadd.f32 0.0, %v1355
      %1357 = vmatprep.mubr.bf16.mxu0 0
      %1358 = vmatmul.mubr.bf16.gmra.mrb[0].mxu0 %v1103
      %v1359 = vpop.f32.mrb[0].mxu0
      %v1360 = vadd.f32 0.0, %v1359
      %v1361 = vpop.f32.mrb[0].mxu0
      %v1362 = vadd.f32 0.0, %v1361
      %v1363 = vpop.f32.mrb[0].mxu0
      %v1364 = vadd.f32 0.0, %v1363
      %v1365 = vpop.f32.mrb[0].mxu0
      %v1366 = vadd.f32 0.0, %v1365
      %1367 = vmatprep.mubr.bf16.mxu0 0
      %1368 = vmatmul.mubr.bf16.gmra.mrb[0].mxu0 %v1104
      %v1369 = vpop.f32.mrb[0].mxu0
      %v1370 = vadd.f32 0.0, %v1369
      %v1371 = vpop.f32.mrb[0].mxu0
      %v1372 = vadd.f32 0.0, %v1371
      %v1373 = vpop.f32.mrb[0].mxu0
      %v1374 = vadd.f32 0.0, %v1373
      %v1375 = vpop.f32.mrb[0].mxu0
      %v1376 = vadd.f32 0.0, %v1375
      %1377 = vdwg.mxu0
      %1378 = vmatprep.subr.bf16.mxu0 0
      %1379 = vmatpush1.bf16.msra.mxu0 %v1219
      %1380 = vmatprep.subr.bf16.mxu0 0
      %1381 = vmatpush1.bf16.msra.mxu0 %v1222
      %1382 = vmatprep.subr.bf16.mxu0 0
      %1383 = vmatpush1.bf16.msra.mxu0 %v1225
      %1384 = vmatprep.subr.bf16.mxu0 0
      %1385 = vmatpush1.bf16.msra.mxu0 %v1228
      %1386 = vmatprep.subr.bf16.mxu0 0
      %1387 = vmatpush1.bf16.msra.mxu0 %v1231
      %1388 = vmatprep.subr.bf16.mxu0 0
      %1389 = vmatpush1.bf16.msra.mxu0 %v1234
      %1390 = vmatprep.subr.bf16.mxu0 0
      %1391 = vmatpush1.bf16.msra.mxu0 %v1237
      %1392 = vmatprep.subr.bf16.mxu0 0
      %1393 = vmatpush1.bf16.msra.mxu0 %v1240
      %1394 = vmatprep.subr.bf16.mxu0 0
      %1395 = vmatpush1.bf16.msra.mxu0 0
      %1396 = vmatprep.subr.bf16.mxu0 0
      %1397 = vmatpush1.bf16.msra.mxu0 0
      %1398 = vmatprep.subr.bf16.mxu0 0
      %1399 = vmatpush1.bf16.msra.mxu0 0
      %1400 = vmatprep.subr.bf16.mxu0 0
      %1401 = vmatpush1.bf16.msra.mxu0 0
      %1402 = vmatprep.subr.bf16.mxu0 0
      %1403 = vmatpush1.bf16.msra.mxu0 0
      %1404 = vmatprep.subr.bf16.mxu0 0
      %1405 = vmatpush1.bf16.msra.mxu0 0
      %1406 = vmatprep.subr.bf16.mxu0 0
      %1407 = vmatpush1.bf16.msra.mxu0 0
      %1408 = vmatprep.subr.bf16.mxu0 0
      %1409 = vmatpush1.bf16.msra.mxu0 0
      %1410 = vmatprep.mubr.bf16.mxu0 0
      %1411 = vmatmul.mubr.bf16.gmra.mrb[0].mxu0 %v1097
      %v1412 = vpop.f32.mrb[0].mxu0
      %v1413 = vadd.f32 0.0, %v1412
      %v1414 = vpop.f32.mrb[0].mxu0
      %v1415 = vpop.f32.mrb[0].mxu0
      %v1416 = vadd.f32 0.0, %v1415
      %v1417 = vpop.f32.mrb[0].mxu0
      %1418 = vmatprep.mubr.bf16.mxu0 0
      %1419 = vmatmul.mubr.bf16.gmra.mrb[0].mxu0 %v1098
      %v1420 = vpop.f32.mrb[0].mxu0
      %v1421 = vadd.f32 0.0, %v1420
      %v1422 = vpop.f32.mrb[0].mxu0
      %v1423 = vpop.f32.mrb[0].mxu0
      %v1424 = vadd.f32 0.0, %v1423
      %v1425 = vpop.f32.mrb[0].mxu0
      %1426 = vmatprep.mubr.bf16.mxu0 0
      %1427 = vmatmul.mubr.bf16.gmra.mrb[0].mxu0 %v1099
      %v1428 = vpop.f32.mrb[0].mxu0
      %v1429 = vadd.f32 0.0, %v1428
      %v1430 = vpop.f32.mrb[0].mxu0
      %v1431 = vpop.f32.mrb[0].mxu0
      %v1432 = vadd.f32 0.0, %v1431
      %v1433 = vpop.f32.mrb[0].mxu0
      %1434 = vmatprep.mubr.bf16.mxu0 0
      %1435 = vmatmul.mubr.bf16.gmra.mrb[0].mxu0 %v1100
      %v1436 = vpop.f32.mrb[0].mxu0
      %v1437 = vadd.f32 0.0, %v1436
      %v1438 = vpop.f32.mrb[0].mxu0
      %v1439 = vpop.f32.mrb[0].mxu0
      %v1440 = vadd.f32 0.0, %v1439
      %v1441 = vpop.f32.mrb[0].mxu0
      %1442 = vmatprep.mubr.bf16.mxu0 0
      %1443 = vmatmul.mubr.bf16.gmra.mrb[0].mxu0 %v1101
      %v1444 = vpop.f32.mrb[0].mxu0
      %v1445 = vadd.f32 0.0, %v1444
      %v1446 = vpop.f32.mrb[0].mxu0
      %v1447 = vpop.f32.mrb[0].mxu0
      %v1448 = vadd.f32 0.0, %v1447
      %v1449 = vpop.f32.mrb[0].mxu0
      %1450 = vmatprep.mubr.bf16.mxu0 0
      %1451 = vmatmul.mubr.bf16.gmra.mrb[0].mxu0 %v1102
      %v1452 = vpop.f32.mrb[0].mxu0
      %v1453 = vadd.f32 0.0, %v1452
      %v1454 = vpop.f32.mrb[0].mxu0
      %v1455 = vpop.f32.mrb[0].mxu0
      %v1456 = vadd.f32 0.0, %v1455
      %v1457 = vpop.f32.mrb[0].mxu0
      %1458 = vmatprep.mubr.bf16.mxu0 0
      %1459 = vmatmul.mubr.bf16.gmra.mrb[0].mxu0 %v1103
      %v1460 = vpop.f32.mrb[0].mxu0
      %v1461 = vadd.f32 0.0, %v1460
      %v1462 = vpop.f32.mrb[0].mxu0
      %v1463 = vpop.f32.mrb[0].mxu0
      %v1464 = vadd.f32 0.0, %v1463
      %v1465 = vpop.f32.mrb[0].mxu0
      %1466 = vmatprep.mubr.bf16.mxu0 0
      %1467 = vmatmul.mubr.bf16.gmra.mrb[0].mxu0 %v1104
      %v1468 = vpop.f32.mrb[0].mxu0
      %v1469 = vadd.f32 0.0, %v1468
      %v1470 = vpop.f32.mrb[0].mxu0
      %v1471 = vpop.f32.mrb[0].mxu0
      %v1472 = vadd.f32 0.0, %v1471
      %v1473 = vpop.f32.mrb[0].mxu0
      %1474 = vdwg.mxu0
      %v1475 = vrot.slane %v1300, 7
      %v1476 = vrot.slane %v1304, 7
      %v1477 = vrot.slane %v1310, 7
      %v1478 = vrot.slane %v1314, 7
      %v1479 = vrot.slane %v1320, 7
      %v1480 = vrot.slane %v1324, 7
      %v1481 = vrot.slane %v1330, 7
      %v1482 = vrot.slane %v1334, 7
      %v1483 = vrot.slane %v1340, 7
      %v1484 = vrot.slane %v1344, 7
      %v1485 = vrot.slane %v1350, 7
      %v1486 = vrot.slane %v1354, 7
      %v1487 = vrot.slane %v1360, 7
      %v1488 = vrot.slane %v1364, 7
      %v1489 = vrot.slane %v1370, 7
      %v1490 = vrot.slane %v1374, 7
      %v1491 = vsel %vm864, %v1489, %v1490
      %v1492 = vsel %vm864, %v1488, %v1489
      %v1493 = vsel %vm864, %v1487, %v1488
      %v1494 = vsel %vm864, %v1486, %v1487
      %v1495 = vsel %vm864, %v1485, %v1486
      %v1496 = vsel %vm864, %v1484, %v1485
      %v1497 = vsel %vm864, %v1483, %v1484
      %v1498 = vsel %vm864, %v1482, %v1483
      %v1499 = vsel %vm864, %v1481, %v1482
      %v1500 = vsel %vm864, %v1480, %v1481
      %v1501 = vsel %vm864, %v1479, %v1480
      %v1502 = vsel %vm864, %v1478, %v1479
      %v1503 = vsel %vm864, %v1477, %v1478
      %v1504 = vsel %vm864, %v1476, %v1477
      %v1505 = vsel %vm864, %v1475, %v1476
      %v1506 = vsel %vm864, %v1490, %v1475
      %v1507 = vsel %vm897, %v1506, 0.0
      %v1508 = vsel %vm898, %v1505, 0.0
      %v1509 = vsel %vm899, %v1504, 0.0
      %v1510 = vsel %vm900, %v1503, 0.0
      %v1511 = vsel %vm901, %v1502, 0.0
      %v1512 = vsel %vm902, %v1501, 0.0
      %v1513 = vsel %vm903, %v1500, 0.0
      %v1514 = vsel %vm904, %v1499, 0.0
      %v1515 = vsel %vm905, %v1498, 0.0
      %v1516 = vsel %vm906, %v1497, 0.0
      %v1517 = vsel %vm907, %v1496, 0.0
      %v1518 = vsel %vm908, %v1495, 0.0
      %v1519 = vsel %vm909, %v1494, 0.0
      %v1520 = vsel %vm910, %v1493, 0.0
      %v1521 = vsel %vm911, %v1492, 0.0
      %v1522 = vsel %vm912, %v1491, 0.0
      %v1523 = vadd.f32 %v1302, %v1507
      %v1524 = vadd.f32 %v1306, %v1508
      %v1525 = vadd.f32 %v1312, %v1509
      %v1526 = vadd.f32 %v1316, %v1510
      %v1527 = vadd.f32 %v1322, %v1511
      %v1528 = vadd.f32 %v1326, %v1512
      %v1529 = vadd.f32 %v1332, %v1513
      %v1530 = vadd.f32 %v1336, %v1514
      %v1531 = vadd.f32 %v1342, %v1515
      %v1532 = vadd.f32 %v1346, %v1516
      %v1533 = vadd.f32 %v1352, %v1517
      %v1534 = vadd.f32 %v1356, %v1518
      %v1535 = vadd.f32 %v1362, %v1519
      %v1536 = vadd.f32 %v1366, %v1520
      %v1537 = vadd.f32 %v1372, %v1521
      %v1538 = vadd.f32 %v1376, %v1522
      %v1539 = vrot.slane %v1413, 1
      %v1540 = vrot.slane %v1416, 1
      %v1541 = vrot.slane %v1421, 1
      %v1542 = vrot.slane %v1424, 1
      %v1543 = vrot.slane %v1429, 1
      %v1544 = vrot.slane %v1432, 1
      %v1545 = vrot.slane %v1437, 1
      %v1546 = vrot.slane %v1440, 1
      %v1547 = vrot.slane %v1445, 1
      %v1548 = vrot.slane %v1448, 1
      %v1549 = vrot.slane %v1453, 1
      %v1550 = vrot.slane %v1456, 1
      %v1551 = vrot.slane %v1461, 1
      %v1552 = vrot.slane %v1464, 1
      %v1553 = vrot.slane %v1469, 1
      %v1554 = vrot.slane %v1472, 1
      %v1555 = vsel %vm977, %v1553, %v1554
      %v1556 = vsel %vm977, %v1552, %v1553
      %v1557 = vsel %vm977, %v1551, %v1552
      %v1558 = vsel %vm977, %v1550, %v1551
      %v1559 = vsel %vm977, %v1549, %v1550
      %v1560 = vsel %vm977, %v1548, %v1549
      %v1561 = vsel %vm977, %v1547, %v1548
      %v1562 = vsel %vm977, %v1546, %v1547
      %v1563 = vsel %vm977, %v1545, %v1546
      %v1564 = vsel %vm977, %v1544, %v1545
      %v1565 = vsel %vm977, %v1543, %v1544
      %v1566 = vsel %vm977, %v1542, %v1543
      %v1567 = vsel %vm977, %v1541, %v1542
      %v1568 = vsel %vm977, %v1540, %v1541
      %v1569 = vsel %vm977, %v1539, %v1540
      %v1570 = vsel %vm977, %v1554, %v1539
      %v1571 = vsel %vm1010, %v1569, 0.0
      %v1572 = vsel %vm1011, %v1568, 0.0
      %v1573 = vsel %vm1012, %v1567, 0.0
      %v1574 = vsel %vm1013, %v1566, 0.0
      %v1575 = vsel %vm1014, %v1565, 0.0
      %v1576 = vsel %vm1015, %v1564, 0.0
      %v1577 = vsel %vm1016, %v1563, 0.0
      %v1578 = vsel %vm1017, %v1562, 0.0
      %v1579 = vsel %vm1018, %v1561, 0.0
      %v1580 = vsel %vm1019, %v1560, 0.0
      %v1581 = vsel %vm1020, %v1559, 0.0
      %v1582 = vsel %vm1021, %v1558, 0.0
      %v1583 = vsel %vm1022, %v1557, 0.0
      %v1584 = vsel %vm1023, %v1556, 0.0
      %v1585 = vsel %vm1024, %v1555, 0.0
      %v1586 = vsel %vm1025, %v1570, 0.0
      %v1587 = vadd.f32 %v1523, %v1571
      %v1588 = vadd.f32 %v1524, %v1572
      %v1589 = vadd.f32 %v1525, %v1573
      %v1590 = vadd.f32 %v1526, %v1574
      %v1591 = vadd.f32 %v1527, %v1575
      %v1592 = vadd.f32 %v1528, %v1576
      %v1593 = vadd.f32 %v1529, %v1577
      %v1594 = vadd.f32 %v1530, %v1578
      %v1595 = vadd.f32 %v1531, %v1579
      %v1596 = vadd.f32 %v1532, %v1580
      %v1597 = vadd.f32 %v1533, %v1581
      %v1598 = vadd.f32 %v1534, %v1582
      %v1599 = vadd.f32 %v1535, %v1583
      %v1600 = vadd.f32 %v1536, %v1584
      %v1601 = vadd.f32 %v1537, %v1585
      %v1602 = vadd.f32 %v1538, %v1586
      %v1603 = vld [vmem:[%s4] sm:$0x1]
      %v1605 = vlaneseq
      %v1606 = vshrl.u32 %v1605, 7
      %v1607 = vsub.s32 0, %v1606
      %v1608 = vrot.slane %v1603, %v1607
      %v1610 = vadd.f32 %v1587, %v1608
      %v1611 = vadd.f32 %v1588, %v1608
      %v1612 = vadd.f32 %v1589, %v1608
      %v1613 = vadd.f32 %v1590, %v1608
      %v1614 = vadd.f32 %v1591, %v1608
      %v1615 = vadd.f32 %v1592, %v1608
      %v1616 = vadd.f32 %v1593, %v1608
      %v1617 = vadd.f32 %v1594, %v1608
      %v1618 = vadd.f32 %v1595, %v1608
      %v1619 = vadd.f32 %v1596, %v1608
      %v1620 = vadd.f32 %v1597, %v1608
      %v1621 = vadd.f32 %v1598, %v1608
      %v1622 = vadd.f32 %v1599, %v1608
      %v1623 = vadd.f32 %v1600, %v1608
      %v1624 = vadd.f32 %v1601, %v1608
      %v1625 = vadd.f32 %v1602, %v1608
      %v1626 = vadd.f32 %v1610, %v229
      %v1627 = vadd.f32 %v1611, %v230
      %v1628 = vadd.f32 %v1612, %v231
      %v1629 = vadd.f32 %v1613, %v232
      %v1630 = vadd.f32 %v1614, %v233
      %v1631 = vadd.f32 %v1615, %v234
      %v1632 = vadd.f32 %v1616, %v235
      %v1633 = vadd.f32 %v1617, %v236
      %v1634 = vadd.f32 %v1618, %v237
      %v1635 = vadd.f32 %v1619, %v238
      %v1636 = vadd.f32 %v1620, %v239
      %v1637 = vadd.f32 %v1621, %v240
      %v1638 = vadd.f32 %v1622, %v241
      %v1639 = vadd.f32 %v1623, %v242
      %v1640 = vadd.f32 %v1624, %v243
      %v1641 = vadd.f32 %v1625, %v244
      %v1642 = vmax.f32 %v1626, 0.0
      %v1643 = vmax.f32 %v1627, 0.0
      %v1644 = vmax.f32 %v1628, 0.0
      %v1645 = vmax.f32 %v1629, 0.0
      %v1646 = vmax.f32 %v1630, 0.0
      %v1647 = vmax.f32 %v1631, 0.0
      %v1648 = vmax.f32 %v1632, 0.0
      %v1649 = vmax.f32 %v1633, 0.0
      %v1650 = vmax.f32 %v1634, 0.0
      %v1651 = vmax.f32 %v1635, 0.0
      %v1652 = vmax.f32 %v1636, 0.0
      %v1653 = vmax.f32 %v1637, 0.0
      %v1654 = vmax.f32 %v1638, 0.0
      %v1655 = vmax.f32 %v1639, 0.0
      %v1656 = vmax.f32 %v1640, 0.0
      %v1657 = vmax.f32 %v1641, 0.0
      %1658 = vst [vmem:[%s226] sm:$0xff] %v1642
      %1659 = vst [vmem:[%s226 + $0x8] sm:$0xff] %v1643
      %1660 = vst [vmem:[%s226 + $0x10] sm:$0xff] %v1644
      %1661 = vst [vmem:[%s226 + $0x18] sm:$0xff] %v1645
      %1662 = vst [vmem:[%s226 + $0x20] sm:$0xff] %v1646
      %1663 = vst [vmem:[%s226 + $0x28] sm:$0xff] %v1647
      %1664 = vst [vmem:[%s226 + $0x30] sm:$0xff] %v1648
      %1665 = vst [vmem:[%s226 + $0x38] sm:$0xff] %v1649
      %1666 = vst [vmem:[%s226 + $0x40] sm:$0xff] %v1650
      %1667 = vst [vmem:[%s226 + $0x48] sm:$0xff] %v1651
      %1668 = vst [vmem:[%s226 + $0x50] sm:$0xff] %v1652
      %1669 = vst [vmem:[%s226 + $0x58] sm:$0xff] %v1653
      %1670 = vst [vmem:[%s226 + $0x60] sm:$0xff] %v1654
      %1671 = vst [vmem:[%s226 + $0x68] sm:$0xff] %v1655
      %1672 = vst [vmem:[%s226 + $0x70] sm:$0xff] %v1656
      %1673 = vst [vmem:[%s226 + $0x78] sm:$0xff] %v1657
      %s1674 = smul.u32 16, %s16
      %p1675 = scmp.lt.s32.totalorder %s1674, 31
      %s1676 = scalar_select %p1675, %s1674, 31
      %s1677 = smul.addr %s1676, 8
      %s1678 = scalar_lea.vmem %s5, %s1677
      // Predicated region
      $region41: #{resblk_basic_nhwc.1} parent=39 // pred_check
        %p1679 = pneg %p144
      $region42: #{resblk_basic_nhwc.1} parent=39 // pred_check_branch
        %1681 = sbr.rel (%p1679) target = $region44
      $region43: #{resblk_basic_nhwc.1} parent=39 // pred_region
        %s1682 = smul.u32 16, %s16
      $region44: #{resblk_basic_nhwc.1} parent=39 // pred_fallthru
        _
    $region40: #{resblk_basic_nhwc.1} parent=5 // pred_fallthru
      _
    %p1683 = scmp.le.s32.totalorder 2, %s11
    // Predicated region
    $region45: #{resblk_basic_nhwc.1} parent=5 // pred_check
      %p1684 = pneg %p1683
    $region46: #{resblk_basic_nhwc.1} parent=5 // pred_check_branch
      %1686 = sbr.rel (%p1684) target = $region48
    $region47: #{resblk_basic_nhwc.1} parent=5 // pred_region
      %s1687 = ssub.s32 %s11, 2
      // Predicated region
      $region49: #{resblk_basic_nhwc.1} parent=47 // pred_check
        %p1688 = pneg %p150
      $region50: #{resblk_basic_nhwc.1} parent=47 // pred_check_branch
        %1690 = sbr.rel (%p1688) target = $region52
      $region51: #{resblk_basic_nhwc.1} parent=47 // pred_region
        %s1691 = smul.u32 16, %s17
        %p1692 = scmp.lt.s32.totalorder %s1691, 31
        %s1693 = scalar_select %p1692, %s1691, 31
        %s1694 = smul.addr %s1693, 8
        %s1695 = scalar_lea.vmem %s5, %s1694
      $region52: #{resblk_basic_nhwc.1} parent=47 // pred_fallthru
        _
    $region48: #{resblk_basic_nhwc.1} parent=5 // pred_fallthru
      _
  $region6: #{resblk_basic_nhwc.1} parent=0 // loop_footer
    %s15 = sadd.s32 1, %s11
  $region7: #{resblk_basic_nhwc.1} parent=0 // loop_footer_branch
    %10 = sbr.rel target = $region3
  $region8: #{resblk_basic_nhwc.1} parent=0 // loop_exit
    _

</llo_original>
